<compile_context>
chip_gen: v7x
topology: tpu7x:2x2x1
jax: 0.10.0
libtpu: 0.0.40
codegen_flags: <defaults>
</compile_context>

<pallas_src>
import functools

import jax
import jax.numpy as jnp
from jax.experimental import pallas as pl
from jax.experimental.pallas import tpu as pltpu


def _transcoder_kernel(x_ref, we_ref, be_ref, wd_ref, bd_ref,
                       feat_ref, recon_ref, imp_ref,
                       imp_acc, *, inv_n):
    """One grid step == one (layer, token-tile) pair.

    Grid: (L, N_tiles); axis 0 = layer (parallel), axis 1 = token tile
          (arbitrary; importance accumulates across it).

    x_ref:    (1, TN, H)  bf16  MLP-input activation tile
    we_ref:   (1, H,  F)  bf16  encoder weight (transposed), resident per layer
    be_ref:   (1, 1,  F)  f32   encoder bias
    wd_ref:   (1, F,  H)  bf16  decoder weight (transposed), resident per layer
    bd_ref:   (1, 1,  H)  f32   decoder bias
    feat_ref: (1, TN, F)  f32   raw encoder output (pre-ReLU)
    recon_ref:(1, TN, H)  f32   decoder(relu(features))
    imp_ref:  (1, 1,  F)  f32   mean(|features|) over all N (written at last tile)
    imp_acc:  (1, F)      f32   VMEM scratch: running sum of |features|
    """
    n = pl.program_id(1)
    n_last = pl.num_programs(1) - 1

    @pl.when(n == 0)
    def _():
        imp_acc[...] = jnp.zeros_like(imp_acc)

    x = x_ref[0]                       # (TN, H) bf16
    we = we_ref[0]                     # (H, F)  bf16
    be = be_ref[0]                     # (1, F)  f32
    wd = wd_ref[0]                     # (F, H)  bf16
    bd = bd_ref[0]                     # (1, H)  f32

    # Encoder: bf16 MXU matmul, f32 accumulate, f32 bias add.
    features = jnp.dot(x, we, preferred_element_type=jnp.float32) + be
    feat_ref[0] = features.astype(feat_ref.dtype)

    # Decoder on ReLU'd features; feed bf16 into the MXU, accumulate in f32.
    features_relu = jnp.maximum(features, 0.0)
    recon = jnp.dot(features_relu.astype(wd.dtype), wd,
                    preferred_element_type=jnp.float32) + bd
    recon_ref[0] = recon.astype(recon_ref.dtype)

    # torch.mean(|features|, dim=(0,1)) over (B, T) == mean over N.
    # Accumulate the SUM per token tile; divide by N only at the end.
    imp_acc[...] += jnp.sum(jnp.abs(features), axis=0, keepdims=True)

    @pl.when(n == n_last)
    def _():
        imp_ref[0] = (imp_acc[...] * inv_n).astype(imp_ref.dtype)


def _pick_token_tile(n):
    """Choose a lane/sublane-friendly token tile that divides N."""
    for tn in (512, 256, 128):
        if n % tn == 0:
            return tn
    return n  # full-extent fallback for tiny/unaligned demo shapes


def cross_layer_transcode(mlp_inputs, w_enc, b_enc, w_dec, b_dec):
    """Run the per-layer transcoder for all layers.

    Args:
      mlp_inputs: [L, B, T, H] captured MLP inputs per layer.
      w_enc:      [L, H, F]    encoder weights (x @ w_enc convention).
      b_enc:      [L, F]       encoder biases.
      w_dec:      [L, F, H]    decoder weights.
      b_dec:      [L, H]       decoder biases.

    Returns:
      features:   [L, B, T, F] f32 raw encoder outputs.
      recon:      [L, B, T, H] f32 decoder(relu(features)).
      importance: [L, F]       f32 mean |features| over batch & sequence.
    """
    L, B, T, H = mlp_inputs.shape
    F = w_enc.shape[-1]
    N = B * T
    TN = _pick_token_tile(N)
    n_tiles = N // TN

    # bf16 operands for the MXU; biases stay f32 for the VPU add.
    x = mlp_inputs.reshape(L, N, H).astype(jnp.bfloat16)
    we = w_enc.astype(jnp.bfloat16)
    wd = w_dec.astype(jnp.bfloat16)
    be = b_enc.reshape(L, 1, F).astype(jnp.float32)
    bd = b_dec.reshape(L, 1, H).astype(jnp.float32)

    grid_spec = pltpu.PrefetchScalarGridSpec(
        num_scalar_prefetch=0,
        grid=(L, n_tiles),           # L outer (parallel), token tiles inner
        in_specs=[
            pl.BlockSpec((1, TN, H), lambda l, n: (l, n, 0)),   # x tile
            pl.BlockSpec((1, H, F), lambda l, n: (l, 0, 0)),    # w_enc (resident per layer)
            pl.BlockSpec((1, 1, F), lambda l, n: (l, 0, 0)),    # b_enc
            pl.BlockSpec((1, F, H), lambda l, n: (l, 0, 0)),    # w_dec (resident per layer)
            pl.BlockSpec((1, 1, H), lambda l, n: (l, 0, 0)),    # b_dec
        ],
        out_specs=[
            pl.BlockSpec((1, TN, F), lambda l, n: (l, n, 0)),   # features
            pl.BlockSpec((1, TN, H), lambda l, n: (l, n, 0)),   # reconstructed
            pl.BlockSpec((1, 1, F), lambda l, n: (l, 0, 0)),    # importance (same block ∀ n)
        ],
        scratch_shapes=[pltpu.VMEM((1, F), jnp.float32)],       # |features| sum accumulator
    )

    kernel = functools.partial(_transcoder_kernel, inv_n=1.0 / float(N))

    features, recon, importance = pl.pallas_call(
        kernel,
        grid_spec=grid_spec,
        out_shape=(
            jax.ShapeDtypeStruct((L, N, F), jnp.float32),
            jax.ShapeDtypeStruct((L, N, H), jnp.float32),
            jax.ShapeDtypeStruct((L, 1, F), jnp.float32),
        ),
        compiler_params=pltpu.CompilerParams(
            dimension_semantics=("parallel", "arbitrary"),
            vmem_limit_bytes=48 * 1024 * 1024,
        ),
    )(x, we, be, wd, bd)

    return (features.reshape(L, B, T, F),
            recon.reshape(L, B, T, H),
            importance.reshape(L, F))


def reference(mlp_inputs, w_enc, b_enc, w_dec, b_dec):
    """Pure-JAX reference mirroring the kernel's bf16-matmul / f32-accumulate path."""
    xb = mlp_inputs.astype(jnp.bfloat16)
    web = w_enc.astype(jnp.bfloat16)
    wdb = w_dec.astype(jnp.bfloat16)
    feats = jnp.einsum("lbth,lhf->lbtf", xb, web,
                       preferred_element_type=jnp.float32) + \
        b_enc[:, None, None, :].astype(jnp.float32)
    relu = jnp.maximum(feats, 0.0)
    recon = jnp.einsum("lbtf,lfh->lbth", relu.astype(jnp.bfloat16), wdb,
                       preferred_element_type=jnp.float32) + \
        b_dec[:, None, None, :].astype(jnp.float32)
    imp = jnp.mean(jnp.abs(feats), axis=(1, 2))
    return feats, recon, imp


if __name__ == "__main__":
    # Small but lane/MXU-aligned configuration:
    # num_layers L, batch B, seq T, hidden H, num_features F.
    # N = B*T = 256 -> two token tiles of TN=128 per layer (exercises the
    # importance accumulation across the inner grid axis).
    L, B, T, H, F = 2, 2, 128, 128, 256

    key = jax.random.PRNGKey(0)
    k_x, k_we, k_be, k_wd, k_bd = jax.random.split(key, 5)

    # Synthesized per-layer MLP inputs (stand-in for GPT-2 hook captures).
    mlp_inputs = jax.random.normal(k_x, (L, B, T, H), dtype=jnp.float32)

    # nn.Linear-style uniform init: U(-1/sqrt(fan_in), 1/sqrt(fan_in)),
    # stored pre-transposed ([in, out]) for the kernel.
    enc_bound = 1.0 / jnp.sqrt(jnp.float32(H))
    dec_bound = 1.0 / jnp.sqrt(jnp.float32(F))
    w_enc = jax.random.uniform(k_we, (L, H, F), jnp.float32,
                               -enc_bound, enc_bound)
    b_enc = jax.random.uniform(k_be, (L, F), jnp.float32,
                               -enc_bound, enc_bound)
    w_dec = jax.random.uniform(k_wd, (L, F, H), jnp.float32,
                               -dec_bound, dec_bound)
    b_dec = jax.random.uniform(k_bd, (L, H), jnp.float32,
                               -dec_bound, dec_bound)

    feature_importance = jnp.zeros((L, F), dtype=jnp.float32)

    run = jax.jit(cross_layer_transcode)
    feats, recon, importance = run(mlp_inputs, w_enc, b_enc, w_dec, b_dec)
    jax.block_until_ready((feats, recon, importance))

    # Forward-pass side effect: feature_importance[layer] += importance
    feature_importance = feature_importance + importance
    jax.block_until_ready(feature_importance)

    # Correctness check against a pure-JAX reference using the same bf16
    # matmul / f32 accumulate recipe.
    ref_feats, ref_recon, ref_imp = reference(
        mlp_inputs, w_enc, b_enc, w_dec, b_dec)
    assert jnp.allclose(feats, ref_feats, atol=1e-2, rtol=1e-2), \
        float(jnp.max(jnp.abs(feats - ref_feats)))
    assert jnp.allclose(recon, ref_recon, atol=1e-2, rtol=1e-2), \
        float(jnp.max(jnp.abs(recon - ref_recon)))
    assert jnp.allclose(importance, ref_imp, atol=1e-2, rtol=1e-2), \
        float(jnp.max(jnp.abs(importance - ref_imp)))

    # Dict mirroring the PyTorch forward() return structure.
    outputs = {
        "feature_activations": {l: feats[l] for l in range(L)},
        "reconstructed_activations": {l: recon[l] for l in range(L)},
    }
    assert outputs["feature_activations"][0].shape == (B, T, F)
    assert outputs["reconstructed_activations"][0].shape == (B, T, H)

    print("KERNEL_OK")
</pallas_src>

<mosaic_0001>
module attributes {stable_mosaic.version = 11 : i64} {
  func.func @_transcoder_kernel(%arg0: i32, %arg1: i32, %arg2: memref<1x256x128xbf16, #tpu.memory_space<vmem>>, %arg3: memref<1x128x256xbf16, #tpu.memory_space<vmem>>, %arg4: memref<1x1x256xf32, #tpu.memory_space<vmem>>, %arg5: memref<1x256x128xbf16, #tpu.memory_space<vmem>>, %arg6: memref<1x1x128xf32, #tpu.memory_space<vmem>>, %arg7: memref<1x256x256xf32, #tpu.memory_space<vmem>>, %arg8: memref<1x256x128xf32, #tpu.memory_space<vmem>>, %arg9: memref<1x1x256xf32, #tpu.memory_space<vmem>>, %arg10: memref<1x256xf32, #tpu.memory_space<vmem>>) attributes {dimension_semantics = [#tpu.dimension_semantics<parallel>, #tpu.dimension_semantics<arbitrary>], iteration_bounds = array<i64: 2, 1>, scalar_prefetch = 0 : i64, scratch_operands = 1 : i64, tpu.core_type = #tpu.core_type<tc>, window_params = [{transform_indices = @transform_0, window_bounds = array<i64: 1, 256, 128>}, {transform_indices = @transform_1, window_bounds = array<i64: 1, 128, 256>}, {transform_indices = @transform_2, window_bounds = array<i64: 1, 1, 256>}, {transform_indices = @transform_3, window_bounds = array<i64: 1, 256, 128>}, {transform_indices = @transform_4, window_bounds = array<i64: 1, 1, 128>}, {transform_indices = @transform_5, window_bounds = array<i64: 1, 256, 256>}, {transform_indices = @transform_6, window_bounds = array<i64: 1, 256, 128>}, {transform_indices = @transform_7, window_bounds = array<i64: 1, 1, 256>}]} {
    %c0_i32 = arith.constant 0 : i32
    %0 = arith.cmpi eq, %arg1, %c0_i32 : i32
    %1 = arith.extui %0 : i1 to i32
    %c0_i32_0 = arith.constant 0 : i32
    %2 = arith.cmpi ne, %1, %c0_i32_0 : i32
    scf.if %2 {
      %cst_30 = arith.constant 0.000000e+00 : f32
      %37 = vector.broadcast %cst_30 : f32 to vector<1x256xf32>
      %c0_31 = arith.constant 0 : index
      %c0_32 = arith.constant 0 : index
      %38 = vector.load %arg10[%c0_31, %c0_32] : memref<1x256xf32, #tpu.memory_space<vmem>>, vector<1x256xf32>
      tpu.vector_store %arg10[%c0_31, %c0_32], %37 {strides = array<i32>} : memref<1x256xf32, #tpu.memory_space<vmem>>, vector<1x256xf32>,
    } else {
    }
    %c0 = arith.constant 0 : index
    %c0_1 = arith.constant 0 : index
    %c0_2 = arith.constant 0 : index
    %3 = vector.load %arg2[%c0, %c0_1, %c0_2] : memref<1x256x128xbf16, #tpu.memory_space<vmem>>, vector<1x256x128xbf16>
    %4 = vector.shape_cast %3 : vector<1x256x128xbf16> to vector<256x128xbf16>
    %c0_3 = arith.constant 0 : index
    %c0_4 = arith.constant 0 : index
    %c0_5 = arith.constant 0 : index
    %5 = vector.load %arg3[%c0_3, %c0_4, %c0_5] : memref<1x128x256xbf16, #tpu.memory_space<vmem>>, vector<1x128x256xbf16>
    %6 = vector.shape_cast %5 : vector<1x128x256xbf16> to vector<128x256xbf16>
    %c0_6 = arith.constant 0 : index
    %c0_7 = arith.constant 0 : index
    %c0_8 = arith.constant 0 : index
    %7 = vector.load %arg4[%c0_6, %c0_7, %c0_8] : memref<1x1x256xf32, #tpu.memory_space<vmem>>, vector<1x1x256xf32>
    %8 = vector.shape_cast %7 : vector<1x1x256xf32> to vector<1x256xf32>
    %c0_9 = arith.constant 0 : index
    %c0_10 = arith.constant 0 : index
    %c0_11 = arith.constant 0 : index
    %9 = vector.load %arg5[%c0_9, %c0_10, %c0_11] : memref<1x256x128xbf16, #tpu.memory_space<vmem>>, vector<1x256x128xbf16>
    %10 = vector.shape_cast %9 : vector<1x256x128xbf16> to vector<256x128xbf16>
    %c0_12 = arith.constant 0 : index
    %c0_13 = arith.constant 0 : index
    %c0_14 = arith.constant 0 : index
    %11 = vector.load %arg6[%c0_12, %c0_13, %c0_14] : memref<1x1x128xf32, #tpu.memory_space<vmem>>, vector<1x1x128xf32>
    %12 = vector.shape_cast %11 : vector<1x1x128xf32> to vector<1x128xf32>
    %cst = arith.constant dense<0.000000e+00> : vector<256x256xf32>
    %13 = tpu.matmul %4, %6, %cst {dimension_numbers = #tpu.dot_dimension_numbers<[1], [0], [0], [1], [0, 0, 1, 1], [], []>} : vector<256x128xbf16>, vector<128x256xbf16>, vector<256x256xf32> -> vector<256x256xf32>
    %14 = vector.broadcast %8 : vector<1x256xf32> to vector<256x256xf32>
    %15 = arith.addf %13, %14 : vector<256x256xf32>
    %c0_15 = arith.constant 0 : index
    %c0_16 = arith.constant 0 : index
    %c0_17 = arith.constant 0 : index
    %16 = vector.load %arg7[%c0_15, %c0_16, %c0_17] : memref<1x256x256xf32, #tpu.memory_space<vmem>>, vector<1x256x256xf32>
    %17 = vector.shape_cast %16 : vector<1x256x256xf32> to vector<256x256xf32>
    %18 = vector.shape_cast %15 : vector<256x256xf32> to vector<1x256x256xf32>
    tpu.vector_store %arg7[%c0_15, %c0_16, %c0_17], %18 {strides = array<i32>} : memref<1x256x256xf32, #tpu.memory_space<vmem>>, vector<1x256x256xf32>,
    %cst_18 = arith.constant 0.000000e+00 : f32
    %19 = vector.broadcast %cst_18 : f32 to vector<256x256xf32>
    %20 = arith.maximumf %15, %19 : vector<256x256xf32>
    %21 = arith.truncf %20 : vector<256x256xf32> to vector<256x256xbf16>
    %cst_19 = arith.constant dense<0.000000e+00> : vector<256x128xf32>
    %22 = tpu.matmul %21, %10, %cst_19 {dimension_numbers = #tpu.dot_dimension_numbers<[1], [0], [0], [1], [0, 0, 1, 1], [], []>} : vector<256x256xbf16>, vector<256x128xbf16>, vector<256x128xf32> -> vector<256x128xf32>
    %23 = vector.broadcast %12 : vector<1x128xf32> to vector<256x128xf32>
    %24 = arith.addf %22, %23 : vector<256x128xf32>
    %c0_20 = arith.constant 0 : index
    %c0_21 = arith.constant 0 : index
    %c0_22 = arith.constant 0 : index
    %25 = vector.load %arg8[%c0_20, %c0_21, %c0_22] : memref<1x256x128xf32, #tpu.memory_space<vmem>>, vector<1x256x128xf32>
    %26 = vector.shape_cast %25 : vector<1x256x128xf32> to vector<256x128xf32>
    %27 = vector.shape_cast %24 : vector<256x128xf32> to vector<1x256x128xf32>
    tpu.vector_store %arg8[%c0_20, %c0_21, %c0_22], %27 {strides = array<i32>} : memref<1x256x128xf32, #tpu.memory_space<vmem>>, vector<1x256x128xf32>,
    %c0_23 = arith.constant 0 : index
    %c0_24 = arith.constant 0 : index
    %28 = vector.load %arg10[%c0_23, %c0_24] : memref<1x256xf32, #tpu.memory_space<vmem>>, vector<1x256xf32>
    %29 = math.absf %15 : vector<256x256xf32>
    %cst_25 = arith.constant dense<0.000000e+00> : vector<256xf32>
    %30 = vector.multi_reduction <add>, %29, %cst_25 [0] : vector<256x256xf32> to vector<256xf32>
    %31 = vector.shape_cast %30 : vector<256xf32> to vector<1x256xf32>
    %32 = arith.addf %28, %31 : vector<1x256xf32>
    %c0_26 = arith.constant 0 : index
    %c0_27 = arith.constant 0 : index
    %33 = vector.load %arg10[%c0_26, %c0_27] : memref<1x256xf32, #tpu.memory_space<vmem>>, vector<1x256xf32>
    tpu.vector_store %arg10[%c0_26, %c0_27], %32 {strides = array<i32>} : memref<1x256xf32, #tpu.memory_space<vmem>>, vector<1x256xf32>,
    %c0_i32_28 = arith.constant 0 : i32
    %34 = arith.cmpi eq, %arg1, %c0_i32_28 : i32
    %35 = arith.extui %34 : i1 to i32
    %c0_i32_29 = arith.constant 0 : i32
    %36 = arith.cmpi ne, %35, %c0_i32_29 : i32
    scf.if %36 {
      %c0_30 = arith.constant 0 : index
      %c0_31 = arith.constant 0 : index
      %37 = vector.load %arg10[%c0_30, %c0_31] : memref<1x256xf32, #tpu.memory_space<vmem>>, vector<1x256xf32>
      %cst_32 = arith.constant 3.906250e-03 : f32
      %38 = vector.broadcast %cst_32 : f32 to vector<1x256xf32>
      %39 = arith.mulf %37, %38 : vector<1x256xf32>
      %c0_33 = arith.constant 0 : index
      %c0_34 = arith.constant 0 : index
      %c0_35 = arith.constant 0 : index
      %40 = vector.load %arg9[%c0_33, %c0_34, %c0_35] : memref<1x1x256xf32, #tpu.memory_space<vmem>>, vector<1x1x256xf32>
      %41 = vector.shape_cast %40 : vector<1x1x256xf32> to vector<1x256xf32>
      %42 = vector.shape_cast %39 : vector<1x256xf32> to vector<1x1x256xf32>
      tpu.vector_store %arg9[%c0_33, %c0_34, %c0_35], %42 {strides = array<i32>} : memref<1x1x256xf32, #tpu.memory_space<vmem>>, vector<1x1x256xf32>,
    } else {
    }
    return
  }
  func.func @transform_0(%arg0: i32, %arg1: i32) -> (i32, i32, i32) {
    %c0_i32 = arith.constant 0 : i32
    %c0_i32_0 = arith.constant 0 : i32
    return %arg0, %arg1, %c0_i32 : i32, i32, i32
  }
  func.func @transform_1(%arg0: i32, %arg1: i32) -> (i32, i32, i32) {
    %c0_i32 = arith.constant 0 : i32
    %c0_i32_0 = arith.constant 0 : i32
    %c0_i32_1 = arith.constant 0 : i32
    return %arg0, %c0_i32, %c0_i32_0 : i32, i32, i32
  }
  func.func @transform_2(%arg0: i32, %arg1: i32) -> (i32, i32, i32) {
    %c0_i32 = arith.constant 0 : i32
    %c0_i32_0 = arith.constant 0 : i32
    %c0_i32_1 = arith.constant 0 : i32
    return %arg0, %c0_i32, %c0_i32_0 : i32, i32, i32
  }
  func.func @transform_3(%arg0: i32, %arg1: i32) -> (i32, i32, i32) {
    %c0_i32 = arith.constant 0 : i32
    %c0_i32_0 = arith.constant 0 : i32
    %c0_i32_1 = arith.constant 0 : i32
    return %arg0, %c0_i32, %c0_i32_0 : i32, i32, i32
  }
  func.func @transform_4(%arg0: i32, %arg1: i32) -> (i32, i32, i32) {
    %c0_i32 = arith.constant 0 : i32
    %c0_i32_0 = arith.constant 0 : i32
    %c0_i32_1 = arith.constant 0 : i32
    return %arg0, %c0_i32, %c0_i32_0 : i32, i32, i32
  }
  func.func @transform_5(%arg0: i32, %arg1: i32) -> (i32, i32, i32) {
    %c0_i32 = arith.constant 0 : i32
    %c0_i32_0 = arith.constant 0 : i32
    return %arg0, %arg1, %c0_i32 : i32, i32, i32
  }
  func.func @transform_6(%arg0: i32, %arg1: i32) -> (i32, i32, i32) {
    %c0_i32 = arith.constant 0 : i32
    %c0_i32_0 = arith.constant 0 : i32
    return %arg0, %arg1, %c0_i32 : i32, i32, i32
  }
  func.func @transform_7(%arg0: i32, %arg1: i32) -> (i32, i32, i32) {
    %c0_i32 = arith.constant 0 : i32
    %c0_i32_0 = arith.constant 0 : i32
    %c0_i32_1 = arith.constant 0 : i32
    return %arg0, %c0_i32, %c0_i32_0 : i32, i32, i32
  }
}

</mosaic_0001>

<llo_original>
// kernel: cross_layer_transcode.1
$region0: #{cross_layer_transcode.1}
  #allocation0 [shape = 'u32[]', space=smem, size = 0x4, offset = 0x4, fixed_abs, tag = 'smem constant byte address 0x4 - core index']
  #allocation1 [shape = 'u32[144,128]{1,0:T(1,128)}', space=vmem, size = 0x12000, scoped, tag = 'internal scratch']
  #allocation2 [shape = 'f32[1,256]{1,0:T(1,128)}', space=vmem, size = 0x400, scoped, tag = 'scratch operand']
  %s0 = inlined_call_operand.vmem [shape: bf16[2,256,128], index: 0, kind: input, shape index: {}]
  %s1 = inlined_call_operand.vmem [shape: bf16[2,128,256], index: 1, kind: input, shape index: {}]
  %s2 = inlined_call_operand.vmem [shape: f32[2,1,256], index: 2, kind: input, shape index: {}]
  %s3 = inlined_call_operand.vmem [shape: bf16[2,256,128], index: 3, kind: input, shape index: {}]
  %s4 = inlined_call_operand.vmem [shape: f32[2,1,128], index: 4, kind: input, shape index: {}]
  %s5 = inlined_call_operand.hbm [shape: f32[2,256,256], index: 5, kind: output, shape index: {0}]
  %s6 = inlined_call_operand.hbm [shape: f32[2,256,128], index: 6, kind: output, shape index: {1}]
  %s7 = inlined_call_operand.vmem [shape: f32[2,1,256], index: 7, kind: output, shape index: {2}]
  %8 = xla_tuple %s5, %s6, %s7
  %s9 = sld [smem:[#allocation0]]
  $region77: #{cross_layer_transcode.1} parent=0
    _
  %s11 = ssub.s32 1, %s9
  %s12 = scalar_select 0, %s11, %s9
  $region1: #{cross_layer_transcode.1} parent=0
    #allocation3 [shape = 'u8[524288]{0}', space=vmem, size = 0x80000, scoped, tag = 'output window, operand 0']
    #allocation4 [shape = 's32[2]{0}', space=sflag, size = 0x8, scoped, tag = 'scoped memory for cross_layer_transcode.1']
    #allocation5 [shape = 'u8[262144]{0}', space=vmem, size = 0x40000, scoped, tag = 'output window, operand 1']
    #allocation6 [shape = 's32[2]{0}', space=sflag, size = 0x8, scoped, tag = 'scoped memory for cross_layer_transcode.1']
    %13 = vsyncpa [#allocation4], 0
    %s14 = scalar_lea.sflag [#allocation4], 1
    %15 = vsyncpa %s14, 0
    %16 = vsyncpa [#allocation6], 0
    %s17 = scalar_lea.sflag [#allocation6], 1
    %18 = vsyncpa %s17, 0
    loop: start=0, step=1, limit=4
    $region2: #{cross_layer_transcode.1} parent=1 // loop_pre_header
      _
    $region3: #{cross_layer_transcode.1} parent=1 // loop_header
      %s20 = sphi 0, %s24
      %p21 = scmp.ge.s32.totalorder %s20, 4
      %s27 = sphi 0, %s39
      %s28 = sphi 0, %s35
      %s29 = sphi 0, %s27
      %s30 = sphi 0, %s28
      %s31 = sphi 0, %s29
      %s32 = sphi 0, %s30
      %s44 = sphi 0, %s46
      %s47 = sphi 0, %s44
      %s48 = sphi 0, %s47
      %s64 = sphi 0, %s48
      %s70 = sphi 0, %s72
      %s73 = sphi 0, %s70
      %s74 = sphi 0, %s73
      %s90 = sphi 0, %s74
      %s96 = sphi 0, %s98
      %s99 = sphi 0, %s96
      %s100 = sphi 0, %s99
      %s116 = sphi 0, %s100
      %s122 = sphi 0, %s124
      %s125 = sphi 0, %s122
      %s126 = sphi 0, %s125
      %s142 = sphi 0, %s126
      %s148 = sphi 0, %s150
      %s151 = sphi 0, %s148
      %s152 = sphi 0, %s151
      %s168 = sphi 0, %s152
      %s176 = sphi 0, %s178
      %s179 = sphi 0, %s176
      %s180 = sphi 0, %s179
      %s196 = sphi 0, %s180
      %s204 = sphi 0, %s206
      %s207 = sphi 0, %s204
      %s208 = sphi 0, %s207
      %s224 = sphi 0, %s208
      %s230 = sphi 0, %s232
      %s233 = sphi 0, %s230
      %s234 = sphi 0, %s233
      %s250 = sphi 0, %s234
    $region4: #{cross_layer_transcode.1} parent=1 // loop_header_branch
      %23 = sbr.rel (%p21) target = $region8
    $region5: #{cross_layer_transcode.1} parent=1 // loop_body
      %s25 = ssub.s32 %s20, 1
      %s26 = ssub.s32 %s20, 2
      %s33 = sadd.s32 1, %s28
      %p34 = scmp.ge.s32.totalorder %s33, 1
      %s35 = scalar_select %p34, 0, %s33
      %s36 = sadd.s32 1, %s27
      %s37 = scalar_select %p34, %s36, %s27
      %p38 = scmp.ge.s32.totalorder %s37, 2
      %s39 = scalar_select %p38, 0, %s37
      %s40 = ssub.s32 %s27, %s39
      %s41 = ssub.s32 %s28, %s35
      %s42 = sor.u32 %s40, %s41
      %p43 = scmp.eq.s32.totalorder %s42, 0
      %s45 = sadd.s32 %s44, 1
      %s46 = scalar_select %p43, %s44, %s45
      %p49 = pneg %p43
      %p50 = scmp.eq.s32.totalorder %s20, 1
      %p51 = por %p49, %p50
      %p52 = scmp.ne.s32.totalorder %s44, %s47
      %p53 = scmp.eq.s32.totalorder %s20, 0
      %p54 = por %p52, %p53
      %p55 = scmp.ne.s32.totalorder %s44, %s47
      %p56 = scmp.eq.s32.totalorder %s25, 1
      %p57 = por %p55, %p56
      %p58 = scmp.ne.s32.totalorder %s47, %s48
      %p59 = scmp.eq.s32.totalorder %s25, 0
      %p60 = por %p58, %p59
      %p61 = scmp.ne.s32.totalorder %s47, %s48
      %p62 = scmp.eq.s32.totalorder %s26, 1
      %p63 = por %p61, %p62
      %p65 = scmp.ne.s32.totalorder %s48, %s64
      %p66 = scmp.eq.s32.totalorder %s26, 0
      %p67 = por %p65, %p66
      %s68 = ssub.s32 %s27, %s39
      %p69 = scmp.eq.s32.totalorder %s68, 0
      %s71 = sadd.s32 %s70, 1
      %s72 = scalar_select %p69, %s70, %s71
      %p75 = pneg %p69
      %p76 = scmp.eq.s32.totalorder %s20, 1
      %p77 = por %p75, %p76
      %p78 = scmp.ne.s32.totalorder %s70, %s73
      %p79 = scmp.eq.s32.totalorder %s20, 0
      %p80 = por %p78, %p79
      %p81 = scmp.ne.s32.totalorder %s70, %s73
      %p82 = scmp.eq.s32.totalorder %s25, 1
      %p83 = por %p81, %p82
      %p84 = scmp.ne.s32.totalorder %s73, %s74
      %p85 = scmp.eq.s32.totalorder %s25, 0
      %p86 = por %p84, %p85
      %p87 = scmp.ne.s32.totalorder %s73, %s74
      %p88 = scmp.eq.s32.totalorder %s26, 1
      %p89 = por %p87, %p88
      %p91 = scmp.ne.s32.totalorder %s74, %s90
      %p92 = scmp.eq.s32.totalorder %s26, 0
      %p93 = por %p91, %p92
      %s94 = ssub.s32 %s27, %s39
      %p95 = scmp.eq.s32.totalorder %s94, 0
      %s97 = sadd.s32 %s96, 1
      %s98 = scalar_select %p95, %s96, %s97
      %p101 = pneg %p95
      %p102 = scmp.eq.s32.totalorder %s20, 1
      %p103 = por %p101, %p102
      %p104 = scmp.ne.s32.totalorder %s96, %s99
      %p105 = scmp.eq.s32.totalorder %s20, 0
      %p106 = por %p104, %p105
      %p107 = scmp.ne.s32.totalorder %s96, %s99
      %p108 = scmp.eq.s32.totalorder %s25, 1
      %p109 = por %p107, %p108
      %p110 = scmp.ne.s32.totalorder %s99, %s100
      %p111 = scmp.eq.s32.totalorder %s25, 0
      %p112 = por %p110, %p111
      %p113 = scmp.ne.s32.totalorder %s99, %s100
      %p114 = scmp.eq.s32.totalorder %s26, 1
      %p115 = por %p113, %p114
      %p117 = scmp.ne.s32.totalorder %s100, %s116
      %p118 = scmp.eq.s32.totalorder %s26, 0
      %p119 = por %p117, %p118
      %s120 = ssub.s32 %s27, %s39
      %p121 = scmp.eq.s32.totalorder %s120, 0
      %s123 = sadd.s32 %s122, 1
      %s124 = scalar_select %p121, %s122, %s123
      %p127 = pneg %p121
      %p128 = scmp.eq.s32.totalorder %s20, 1
      %p129 = por %p127, %p128
      %p130 = scmp.ne.s32.totalorder %s122, %s125
      %p131 = scmp.eq.s32.totalorder %s20, 0
      %p132 = por %p130, %p131
      %p133 = scmp.ne.s32.totalorder %s122, %s125
      %p134 = scmp.eq.s32.totalorder %s25, 1
      %p135 = por %p133, %p134
      %p136 = scmp.ne.s32.totalorder %s125, %s126
      %p137 = scmp.eq.s32.totalorder %s25, 0
      %p138 = por %p136, %p137
      %p139 = scmp.ne.s32.totalorder %s125, %s126
      %p140 = scmp.eq.s32.totalorder %s26, 1
      %p141 = por %p139, %p140
      %p143 = scmp.ne.s32.totalorder %s126, %s142
      %p144 = scmp.eq.s32.totalorder %s26, 0
      %p145 = por %p143, %p144
      %s146 = ssub.s32 %s27, %s39
      %p147 = scmp.eq.s32.totalorder %s146, 0
      %s149 = sadd.s32 %s148, 1
      %s150 = scalar_select %p147, %s148, %s149
      %p153 = pneg %p147
      %p154 = scmp.eq.s32.totalorder %s20, 1
      %p155 = por %p153, %p154
      %p156 = scmp.ne.s32.totalorder %s148, %s151
      %p157 = scmp.eq.s32.totalorder %s20, 0
      %p158 = por %p156, %p157
      %p159 = scmp.ne.s32.totalorder %s148, %s151
      %p160 = scmp.eq.s32.totalorder %s25, 1
      %p161 = por %p159, %p160
      %p162 = scmp.ne.s32.totalorder %s151, %s152
      %p163 = scmp.eq.s32.totalorder %s25, 0
      %p164 = por %p162, %p163
      %p165 = scmp.ne.s32.totalorder %s151, %s152
      %p166 = scmp.eq.s32.totalorder %s26, 1
      %p167 = por %p165, %p166
      %p169 = scmp.ne.s32.totalorder %s152, %s168
      %p170 = scmp.eq.s32.totalorder %s26, 0
      %p171 = por %p169, %p170
      %s172 = ssub.s32 %s27, %s39
      %s173 = ssub.s32 %s28, %s35
      %s174 = sor.u32 %s172, %s173
      %p175 = scmp.eq.s32.totalorder %s174, 0
      %s177 = sadd.s32 %s176, 1
      %s178 = scalar_select %p175, %s176, %s177
      %p181 = pneg %p175
      %p182 = scmp.eq.s32.totalorder %s20, 1
      %p183 = por %p181, %p182
      %p184 = scmp.ne.s32.totalorder %s176, %s179
      %p185 = scmp.eq.s32.totalorder %s20, 0
      %p186 = por %p184, %p185
      %p187 = scmp.ne.s32.totalorder %s176, %s179
      %p188 = scmp.eq.s32.totalorder %s25, 1
      %p189 = por %p187, %p188
      %p190 = scmp.ne.s32.totalorder %s179, %s180
      %p191 = scmp.eq.s32.totalorder %s25, 0
      %p192 = por %p190, %p191
      %p193 = scmp.ne.s32.totalorder %s179, %s180
      %p194 = scmp.eq.s32.totalorder %s26, 1
      %p195 = por %p193, %p194
      %p197 = scmp.ne.s32.totalorder %s180, %s196
      %p198 = scmp.eq.s32.totalorder %s26, 0
      %p199 = por %p197, %p198
      %s200 = ssub.s32 %s27, %s39
      %s201 = ssub.s32 %s28, %s35
      %s202 = sor.u32 %s200, %s201
      %p203 = scmp.eq.s32.totalorder %s202, 0
      %s205 = sadd.s32 %s204, 1
      %s206 = scalar_select %p203, %s204, %s205
      %p209 = pneg %p203
      %p210 = scmp.eq.s32.totalorder %s20, 1
      %p211 = por %p209, %p210
      %p212 = scmp.ne.s32.totalorder %s204, %s207
      %p213 = scmp.eq.s32.totalorder %s20, 0
      %p214 = por %p212, %p213
      %p215 = scmp.ne.s32.totalorder %s204, %s207
      %p216 = scmp.eq.s32.totalorder %s25, 1
      %p217 = por %p215, %p216
      %p218 = scmp.ne.s32.totalorder %s207, %s208
      %p219 = scmp.eq.s32.totalorder %s25, 0
      %p220 = por %p218, %p219
      %p221 = scmp.ne.s32.totalorder %s207, %s208
      %p222 = scmp.eq.s32.totalorder %s26, 1
      %p223 = por %p221, %p222
      %p225 = scmp.ne.s32.totalorder %s208, %s224
      %p226 = scmp.eq.s32.totalorder %s26, 0
      %p227 = por %p225, %p226
      %s228 = ssub.s32 %s27, %s39
      %p229 = scmp.eq.s32.totalorder %s228, 0
      %s231 = sadd.s32 %s230, 1
      %s232 = scalar_select %p229, %s230, %s231
      %p235 = pneg %p229
      %p236 = scmp.eq.s32.totalorder %s20, 1
      %p237 = por %p235, %p236
      %p238 = scmp.ne.s32.totalorder %s230, %s233
      %p239 = scmp.eq.s32.totalorder %s20, 0
      %p240 = por %p238, %p239
      %p241 = scmp.ne.s32.totalorder %s230, %s233
      %p242 = scmp.eq.s32.totalorder %s25, 1
      %p243 = por %p241, %p242
      %p244 = scmp.ne.s32.totalorder %s233, %s234
      %p245 = scmp.eq.s32.totalorder %s25, 0
      %p246 = por %p244, %p245
      %p247 = scmp.ne.s32.totalorder %s233, %s234
      %p248 = scmp.eq.s32.totalorder %s26, 1
      %p249 = por %p247, %p248
      %p251 = scmp.ne.s32.totalorder %s234, %s250
      %p252 = scmp.eq.s32.totalorder %s26, 0
      %p253 = por %p251, %p252
      %p254 = scmp.le.s32.totalorder 1, %s20
      %p255 = scmp.lt.s32.totalorder %s20, 3
      %p256 = pnand %p254, %p255
      %p257 = pneg %p256
      // Predicated region
      $region9: #{cross_layer_transcode.1} parent=5 // pred_check
        _
      $region10: #{cross_layer_transcode.1} parent=5 // pred_check_branch
        %259 = sbr.rel (%p256) target = $region12
      $region11: #{cross_layer_transcode.1} parent=5 // pred_region
        %s260 = ssub.s32 %s20, 1
      $region12: #{cross_layer_transcode.1} parent=5 // pred_fallthru
        _
      %p261 = scmp.lt.s32.totalorder %s20, 2
      // Predicated region
      $region13: #{cross_layer_transcode.1} parent=5 // pred_check
        %p262 = pneg %p261
      $region14: #{cross_layer_transcode.1} parent=5 // pred_check_branch
        %264 = sbr.rel (%p262) target = $region16
      $region15: #{cross_layer_transcode.1} parent=5 // pred_region
        // Predicated region
        $region17: #{cross_layer_transcode.1} parent=15 // pred_check
          %p265 = pneg %p54
        $region18: #{cross_layer_transcode.1} parent=15 // pred_check_branch
          %267 = sbr.rel (%p265) target = $region20
        $region19: #{cross_layer_transcode.1} parent=15 // pred_region
          %s268 = smul.u32 32, %s28
          %p269 = scmp.lt.s32.totalorder %s27, 1
          %s270 = scalar_select %p269, %s27, 1
          %p271 = scmp.lt.s32.totalorder %s268, 31
          %s272 = scalar_select %p271, %s268, 31
          %s273 = smul.addr %s270, 32
          %s274 = sadd.s32 %s272, %s273
          %s275 = smul.addr %s274, 4
          %s276 = scalar_lea.vmem %s0, %s275
          %s277 = smul.u32 32, %s28
        $region20: #{cross_layer_transcode.1} parent=15 // pred_fallthru
          _
        // Predicated region
        $region21: #{cross_layer_transcode.1} parent=15 // pred_check
          %p278 = pneg %p80
        $region22: #{cross_layer_transcode.1} parent=15 // pred_check_branch
          %280 = sbr.rel (%p278) target = $region24
        $region23: #{cross_layer_transcode.1} parent=15 // pred_region
          %p281 = scmp.lt.s32.totalorder %s27, 1
          %s282 = scalar_select %p281, %s27, 1
          %s283 = smul.addr %s282, 32
          %s284 = smul.addr %s283, 4
          %s285 = scalar_lea.vmem %s1, %s284
        $region24: #{cross_layer_transcode.1} parent=15 // pred_fallthru
          _
        // Predicated region
        $region25: #{cross_layer_transcode.1} parent=15 // pred_check
          %p286 = pneg %p106
        $region26: #{cross_layer_transcode.1} parent=15 // pred_check_branch
          %288 = sbr.rel (%p286) target = $region28
        $region27: #{cross_layer_transcode.1} parent=15 // pred_region
          %p289 = scmp.lt.s32.totalorder %s27, 1
          %s290 = scalar_select %p289, %s27, 1
          %s291 = smul.addr %s290, 2
          %s292 = scalar_lea.vmem %s2, %s291
        $region28: #{cross_layer_transcode.1} parent=15 // pred_fallthru
          _
        // Predicated region
        $region29: #{cross_layer_transcode.1} parent=15 // pred_check
          %p293 = pneg %p132
        $region30: #{cross_layer_transcode.1} parent=15 // pred_check_branch
          %295 = sbr.rel (%p293) target = $region32
        $region31: #{cross_layer_transcode.1} parent=15 // pred_region
          %p296 = scmp.lt.s32.totalorder %s27, 1
          %s297 = scalar_select %p296, %s27, 1
          %s298 = smul.addr %s297, 32
          %s299 = smul.addr %s298, 4
          %s300 = scalar_lea.vmem %s3, %s299
        $region32: #{cross_layer_transcode.1} parent=15 // pred_fallthru
          _
        // Predicated region
        $region33: #{cross_layer_transcode.1} parent=15 // pred_check
          %p301 = pneg %p158
        $region34: #{cross_layer_transcode.1} parent=15 // pred_check_branch
          %303 = sbr.rel (%p301) target = $region36
        $region35: #{cross_layer_transcode.1} parent=15 // pred_region
          %p304 = scmp.lt.s32.totalorder %s27, 1
          %s305 = scalar_select %p304, %s27, 1
          %s306 = scalar_lea.vmem %s4, %s305
        $region36: #{cross_layer_transcode.1} parent=15 // pred_fallthru
          _
      $region16: #{cross_layer_transcode.1} parent=5 // pred_fallthru
        _
      %p307 = scmp.le.s32.totalorder 1, %s20
      %p308 = scmp.lt.s32.totalorder %s20, 3
      %p309 = pnand %p307, %p308
      %p310 = pneg %p309
      // Predicated region
      $region37: #{cross_layer_transcode.1} parent=5 // pred_check
        _
      $region38: #{cross_layer_transcode.1} parent=5 // pred_check_branch
        %312 = sbr.rel (%p309) target = $region40
      $region39: #{cross_layer_transcode.1} parent=5 // pred_region
        %s313 = ssub.s32 %s20, 1
        %s314 = smul.u32 32, %s30
        %p315 = scmp.lt.s32.totalorder %s29, 1
        %s316 = scalar_select %p315, %s29, 1
        %p317 = scmp.lt.s32.totalorder %s314, 31
        %s318 = scalar_select %p317, %s314, 31
        %s319 = smul.addr %s316, 32
        %s320 = sadd.s32 %s318, %s319
        %s321 = smul.addr %s320, 4
        %s322 = scalar_lea.vmem %s0, %s321
        %p323 = pneg %p60
        %p324 = pneg %p57
        %p325 = scmp.lt.s32.totalorder %s29, 1
        %s326 = scalar_select %p325, %s29, 1
        %s327 = smul.addr %s326, 32
        %s328 = smul.addr %s327, 4
        %s329 = scalar_lea.vmem %s1, %s328
        %p330 = pneg %p86
        %p331 = pneg %p83
        %p332 = scmp.lt.s32.totalorder %s29, 1
        %s333 = scalar_select %p332, %s29, 1
        %s334 = smul.addr %s333, 2
        %s335 = scalar_lea.vmem %s2, %s334
        %p336 = pneg %p112
        %p337 = pneg %p109
        %p338 = scmp.lt.s32.totalorder %s29, 1
        %s339 = scalar_select %p338, %s29, 1
        %s340 = smul.addr %s339, 32
        %s341 = smul.addr %s340, 4
        %s342 = scalar_lea.vmem %s3, %s341
        %p343 = pneg %p138
        %p344 = pneg %p135
        %p345 = scmp.lt.s32.totalorder %s29, 1
        %s346 = scalar_select %p345, %s29, 1
        %s347 = scalar_lea.vmem %s4, %s346
        %p348 = pneg %p164
        %p349 = pneg %p161
        %p350 = pneg %p192
        %p351 = pneg %p189
        %s352 = sand.u32 %s179, 1
        %s353 = scalar_lea.sflag [#allocation4], %s352
        %s354 = sand.u32 %s179, 1
        %s355 = smul.addr %s354, 512
        %s356 = scalar_lea.vmem [#allocation3], %s355
        %p357 = pneg %p220
        %p358 = pneg %p217
        %s359 = sand.u32 %s207, 1
        %s360 = scalar_lea.sflag [#allocation6], %s359
        %s361 = sand.u32 %s207, 1
        %s362 = smul.addr %s361, 256
        %s363 = scalar_lea.vmem [#allocation5], %s362
        %p364 = pneg %p246
        %p365 = pneg %p243
        %p366 = scmp.lt.s32.totalorder %s29, 1
        %s367 = scalar_select %p366, %s29, 1
        %s368 = smul.addr %s367, 2
        %s369 = scalar_lea.vmem %s7, %s368
        %s370 = smul.u32 32, %s30
        %p371 = scmp.lt.s32.totalorder %s29, 1
        %s372 = scalar_select %p371, %s29, 1
        %p373 = scmp.lt.s32.totalorder %s370, 31
        %s374 = scalar_select %p373, %s370, 31
        %s375 = smul.addr %s372, 32
        %s376 = sadd.s32 %s374, %s375
        %s377 = smul.addr %s376, 4
        %s378 = scalar_lea.vmem %s0, %s377
        %s379 = smul.u32 32, %s30
        %p380 = scmp.lt.s32.totalorder %s29, 1
        %s381 = scalar_select %p380, %s29, 1
        %s382 = smul.addr %s381, 32
        %s383 = smul.addr %s382, 4
        %s384 = scalar_lea.vmem %s1, %s383
        %p385 = scmp.lt.s32.totalorder %s29, 1
        %s386 = scalar_select %p385, %s29, 1
        %s387 = smul.addr %s386, 2
        %s388 = scalar_lea.vmem %s2, %s387
        %p389 = scmp.lt.s32.totalorder %s29, 1
        %s390 = scalar_select %p389, %s29, 1
        %s391 = smul.addr %s390, 32
        %s392 = smul.addr %s391, 4
        %s393 = scalar_lea.vmem %s3, %s392
        %p394 = scmp.lt.s32.totalorder %s29, 1
        %s395 = scalar_select %p394, %s29, 1
        %s396 = scalar_lea.vmem %s4, %s395
        %s397 = smul.u32 32, %s30
        %s398 = smul.u32 32, %s30
        %p399 = scmp.lt.s32.totalorder %s29, 1
        %s400 = scalar_select %p399, %s29, 1
        %s401 = smul.addr %s400, 2
        %s402 = scalar_lea.vmem %s7, %s401
        %p404 = scmp.eq.s32.totalorder %s30, 0
        // Predicated region
        $region41: #{cross_layer_transcode.1} parent=39 // pred_check
          %p405 = pneg %p404
        $region42: #{cross_layer_transcode.1} parent=39 // pred_check_branch
          %407 = sbr.rel (%p405) target = $region44
        $region43: #{cross_layer_transcode.1} parent=39 // pred_region
          %v408 = vlaneseq
          %vm409 = vcmp.ge.s32.totalorder %v408, 0
          %vm410 = vcmp.lt.s32.totalorder %v408, 256
          %vm411 = vmand %vm409, %vm410
          %412 = vst.msk [vmem:[#allocation2] sm:$0x3] %vm411, 0.0
        $region44: #{cross_layer_transcode.1} parent=39 // pred_fallthru
          _
        %v413 = vld [vmem:[%s378] sm:$0xf]
        %v414 = vld [vmem:[%s378 + $0x4] sm:$0xf]
        %v415 = vld [vmem:[%s378 + $0x8] sm:$0xf]
        %v416 = vld [vmem:[%s378 + $0xc] sm:$0xf]
        %v417 = vld [vmem:[%s378 + $0x10] sm:$0xf]
        %v418 = vld [vmem:[%s378 + $0x14] sm:$0xf]
        %v419 = vld [vmem:[%s378 + $0x18] sm:$0xf]
        %v420 = vld [vmem:[%s378 + $0x1c] sm:$0xf]
        %v421 = vld [vmem:[%s378 + $0x20] sm:$0xf]
        %v422 = vld [vmem:[%s378 + $0x24] sm:$0xf]
        %v423 = vld [vmem:[%s378 + $0x28] sm:$0xf]
        %v424 = vld [vmem:[%s378 + $0x2c] sm:$0xf]
        %v425 = vld [vmem:[%s378 + $0x30] sm:$0xf]
        %v426 = vld [vmem:[%s378 + $0x34] sm:$0xf]
        %v427 = vld [vmem:[%s378 + $0x38] sm:$0xf]
        %v428 = vld [vmem:[%s378 + $0x3c] sm:$0xf]
        %v429 = vld [vmem:[%s378 + $0x40] sm:$0xf]
        %v430 = vld [vmem:[%s378 + $0x44] sm:$0xf]
        %v431 = vld [vmem:[%s378 + $0x48] sm:$0xf]
        %v432 = vld [vmem:[%s378 + $0x4c] sm:$0xf]
        %v433 = vld [vmem:[%s378 + $0x50] sm:$0xf]
        %v434 = vld [vmem:[%s378 + $0x54] sm:$0xf]
        %v435 = vld [vmem:[%s378 + $0x58] sm:$0xf]
        %v436 = vld [vmem:[%s378 + $0x5c] sm:$0xf]
        %v437 = vld [vmem:[%s378 + $0x60] sm:$0xf]
        %v438 = vld [vmem:[%s378 + $0x64] sm:$0xf]
        %v439 = vld [vmem:[%s378 + $0x68] sm:$0xf]
        %v440 = vld [vmem:[%s378 + $0x6c] sm:$0xf]
        %v441 = vld [vmem:[%s378 + $0x70] sm:$0xf]
        %v442 = vld [vmem:[%s378 + $0x74] sm:$0xf]
        %v443 = vld [vmem:[%s378 + $0x78] sm:$0xf]
        %v444 = vld [vmem:[%s378 + $0x7c] sm:$0xf]
        %v445 = vld [vmem:[%s384] sm:$0xff]
        %v446 = vld [vmem:[%s384 + $0x8] sm:$0xff]
        %v447 = vld [vmem:[%s384 + $0x10] sm:$0xff]
        %v448 = vld [vmem:[%s384 + $0x18] sm:$0xff]
        %v449 = vld [vmem:[%s384 + $0x20] sm:$0xff]
        %v450 = vld [vmem:[%s384 + $0x28] sm:$0xff]
        %v451 = vld [vmem:[%s384 + $0x30] sm:$0xff]
        %v452 = vld [vmem:[%s384 + $0x38] sm:$0xff]
        %v453 = vld [vmem:[%s384 + $0x40] sm:$0xff]
        %v454 = vld [vmem:[%s384 + $0x48] sm:$0xff]
        %v455 = vld [vmem:[%s384 + $0x50] sm:$0xff]
        %v456 = vld [vmem:[%s384 + $0x58] sm:$0xff]
        %v457 = vld [vmem:[%s384 + $0x60] sm:$0xff]
        %v458 = vld [vmem:[%s384 + $0x68] sm:$0xff]
        %v459 = vld [vmem:[%s384 + $0x70] sm:$0xff]
        %v460 = vld [vmem:[%s384 + $0x78] sm:$0xff]
        %v461 = vld [vmem:[%s388] sm:$0x3]
        %v462 = vld [vmem:[%s393] sm:$0xf]
        %v463 = vld [vmem:[%s393 + $0x4] sm:$0xf]
        %v464 = vld [vmem:[%s393 + $0x8] sm:$0xf]
        %v465 = vld [vmem:[%s393 + $0xc] sm:$0xf]
        %v466 = vld [vmem:[%s393 + $0x10] sm:$0xf]
        %v467 = vld [vmem:[%s393 + $0x14] sm:$0xf]
        %v468 = vld [vmem:[%s393 + $0x18] sm:$0xf]
        %v469 = vld [vmem:[%s393 + $0x1c] sm:$0xf]
        %v470 = vld [vmem:[%s393 + $0x20] sm:$0xf]
        %v471 = vld [vmem:[%s393 + $0x24] sm:$0xf]
        %v472 = vld [vmem:[%s393 + $0x28] sm:$0xf]
        %v473 = vld [vmem:[%s393 + $0x2c] sm:$0xf]
        %v474 = vld [vmem:[%s393 + $0x30] sm:$0xf]
        %v475 = vld [vmem:[%s393 + $0x34] sm:$0xf]
        %v476 = vld [vmem:[%s393 + $0x38] sm:$0xf]
        %v477 = vld [vmem:[%s393 + $0x3c] sm:$0xf]
        %v478 = vld [vmem:[%s393 + $0x40] sm:$0xf]
        %v479 = vld [vmem:[%s393 + $0x44] sm:$0xf]
        %v480 = vld [vmem:[%s393 + $0x48] sm:$0xf]
        %v481 = vld [vmem:[%s393 + $0x4c] sm:$0xf]
        %v482 = vld [vmem:[%s393 + $0x50] sm:$0xf]
        %v483 = vld [vmem:[%s393 + $0x54] sm:$0xf]
        %v484 = vld [vmem:[%s393 + $0x58] sm:$0xf]
        %v485 = vld [vmem:[%s393 + $0x5c] sm:$0xf]
        %v486 = vld [vmem:[%s393 + $0x60] sm:$0xf]
        %v487 = vld [vmem:[%s393 + $0x64] sm:$0xf]
        %v488 = vld [vmem:[%s393 + $0x68] sm:$0xf]
        %v489 = vld [vmem:[%s393 + $0x6c] sm:$0xf]
        %v490 = vld [vmem:[%s393 + $0x70] sm:$0xf]
        %v491 = vld [vmem:[%s393 + $0x74] sm:$0xf]
        %v492 = vld [vmem:[%s393 + $0x78] sm:$0xf]
        %v493 = vld [vmem:[%s393 + $0x7c] sm:$0xf]
        %v494 = vld [vmem:[%s396] sm:$0x1]
        %v496 = vlaneseq
        %v497 = vshrl.u32 %v496, 7
        %v498 = vsub.s32 0, %v497
        %v499 = vrot.slane %v461, %v498
        %v500 = vlaneseq
        %v501 = vshrl.u32 %v500, 7
        %v502 = vsub.s32 1, %v501
        %v503 = vrot.slane %v461, %v502
        %v538 = vunpack.c.l.b16 %v413
        %v539 = vunpack.c.l.b16 %v414
        %v540 = vunpack.c.l.b16 %v415
        %v541 = vunpack.c.l.b16 %v416
        %v542 = vunpack.c.l.b16 %v417
        %v543 = vunpack.c.l.b16 %v418
        %v544 = vunpack.c.l.b16 %v419
        %v545 = vunpack.c.l.b16 %v420
        %v546 = vunpack.c.l.b16 %v421
        %v547 = vunpack.c.l.b16 %v422
        %v548 = vunpack.c.l.b16 %v423
        %v549 = vunpack.c.l.b16 %v424
        %v550 = vunpack.c.l.b16 %v425
        %v551 = vunpack.c.l.b16 %v426
        %v552 = vunpack.c.l.b16 %v427
        %v553 = vunpack.c.l.b16 %v428
        %v554 = vunpack.c.l.b16 %v429
        %v555 = vunpack.c.l.b16 %v430
        %v556 = vunpack.c.l.b16 %v431
        %v557 = vunpack.c.l.b16 %v432
        %v558 = vunpack.c.l.b16 %v433
        %v559 = vunpack.c.l.b16 %v434
        %v560 = vunpack.c.l.b16 %v435
        %v561 = vunpack.c.l.b16 %v436
        %v562 = vunpack.c.l.b16 %v437
        %v563 = vunpack.c.l.b16 %v438
        %v564 = vunpack.c.l.b16 %v439
        %v565 = vunpack.c.l.b16 %v440
        %v566 = vunpack.c.l.b16 %v441
        %v567 = vunpack.c.l.b16 %v442
        %v568 = vunpack.c.l.b16 %v443
        %v569 = vunpack.c.l.b16 %v444
        %v570 = vpack.c.b16 %v539, %v538
        %v571 = vpack.c.b16 %v541, %v540
        %v572 = vpack.c.b16 %v543, %v542
        %v573 = vpack.c.b16 %v545, %v544
        %v574 = vpack.c.b16 %v547, %v546
        %v575 = vpack.c.b16 %v549, %v548
        %v576 = vpack.c.b16 %v551, %v550
        %v577 = vpack.c.b16 %v553, %v552
        %v578 = vpack.c.b16 %v555, %v554
        %v579 = vpack.c.b16 %v557, %v556
        %v580 = vpack.c.b16 %v559, %v558
        %v581 = vpack.c.b16 %v561, %v560
        %v582 = vpack.c.b16 %v563, %v562
        %v583 = vpack.c.b16 %v565, %v564
        %v584 = vpack.c.b16 %v567, %v566
        %v585 = vpack.c.b16 %v569, %v568
        %v618 = vunpack.c.l.b16 %v445
        %v619 = vunpack.c.h.b16 %v445
        %v620 = vunpack.c.l.b16 %v446
        %v621 = vunpack.c.h.b16 %v446
        %v622 = vunpack.c.l.b16 %v447
        %v623 = vunpack.c.h.b16 %v447
        %v624 = vunpack.c.l.b16 %v448
        %v625 = vunpack.c.h.b16 %v448
        %v626 = vunpack.c.l.b16 %v449
        %v627 = vunpack.c.h.b16 %v449
        %v628 = vunpack.c.l.b16 %v450
        %v629 = vunpack.c.h.b16 %v450
        %v630 = vunpack.c.l.b16 %v451
        %v631 = vunpack.c.h.b16 %v451
        %v632 = vunpack.c.l.b16 %v452
        %v633 = vunpack.c.h.b16 %v452
        %v634 = vunpack.c.l.b16 %v453
        %v635 = vunpack.c.h.b16 %v453
        %v636 = vunpack.c.l.b16 %v454
        %v637 = vunpack.c.h.b16 %v454
        %v638 = vunpack.c.l.b16 %v455
        %v639 = vunpack.c.h.b16 %v455
        %v640 = vunpack.c.l.b16 %v456
        %v641 = vunpack.c.h.b16 %v456
        %v642 = vunpack.c.l.b16 %v457
        %v643 = vunpack.c.h.b16 %v457
        %v644 = vunpack.c.l.b16 %v458
        %v645 = vunpack.c.h.b16 %v458
        %v646 = vunpack.c.l.b16 %v459
        %v647 = vunpack.c.h.b16 %v459
        %v648 = vunpack.c.l.b16 %v460
        %v649 = vunpack.c.h.b16 %v460
        %v650 = vpack.c.b16 %v620, %v618
        %v651 = vpack.c.b16 %v621, %v619
        %v652 = vpack.c.b16 %v624, %v622
        %v653 = vpack.c.b16 %v625, %v623
        %v654 = vpack.c.b16 %v628, %v626
        %v655 = vpack.c.b16 %v629, %v627
        %v656 = vpack.c.b16 %v632, %v630
        %v657 = vpack.c.b16 %v633, %v631
        %v658 = vpack.c.b16 %v636, %v634
        %v659 = vpack.c.b16 %v637, %v635
        %v660 = vpack.c.b16 %v640, %v638
        %v661 = vpack.c.b16 %v641, %v639
        %v662 = vpack.c.b16 %v644, %v642
        %v663 = vpack.c.b16 %v645, %v643
        %v664 = vpack.c.b16 %v648, %v646
        %v665 = vpack.c.b16 %v649, %v647
        %682 = vmatprep.subr.bf16.mxu0 %v651
        %683 = vmatpush1.bf16.msra.mxu0 %v650
        %684 = vmatprep.subr.bf16.mxu0 %v653
        %685 = vmatpush1.bf16.msra.mxu0 %v652
        %686 = vmatprep.subr.bf16.mxu0 %v655
        %687 = vmatpush1.bf16.msra.mxu0 %v654
        %688 = vmatprep.subr.bf16.mxu0 %v657
        %689 = vmatpush1.bf16.msra.mxu0 %v656
        %690 = vmatprep.subr.bf16.mxu0 %v659
        %691 = vmatpush1.bf16.msra.mxu0 %v658
        %692 = vmatprep.subr.bf16.mxu0 %v661
        %693 = vmatpush1.bf16.msra.mxu0 %v660
        %694 = vmatprep.subr.bf16.mxu0 %v663
        %695 = vmatpush1.bf16.msra.mxu0 %v662
        %696 = vmatprep.subr.bf16.mxu0 %v665
        %697 = vmatpush1.bf16.msra.mxu0 %v664
        %698 = vmatprep.subr.bf16.mxu0 0
        %699 = vmatpush1.bf16.msra.mxu0 0
        %700 = vmatprep.subr.bf16.mxu0 0
        %701 = vmatpush1.bf16.msra.mxu0 0
        %702 = vmatprep.subr.bf16.mxu0 0
        %703 = vmatpush1.bf16.msra.mxu0 0
        %704 = vmatprep.subr.bf16.mxu0 0
        %705 = vmatpush1.bf16.msra.mxu0 0
        %706 = vmatprep.subr.bf16.mxu0 0
        %707 = vmatpush1.bf16.msra.mxu0 0
        %708 = vmatprep.subr.bf16.mxu0 0
        %709 = vmatpush1.bf16.msra.mxu0 0
        %710 = vmatprep.subr.bf16.mxu0 0
        %711 = vmatpush1.bf16.msra.mxu0 0
        %712 = vmatprep.subr.bf16.mxu0 0
        %713 = vmatpush1.bf16.msra.mxu0 0
        %714 = vmatprep.mubr.bf16.mxu0 0
        %715 = vmatmul.mubr.bf16.gmra.mrb[0].mxu0 %v570
        %v716 = vpop.f32.mrb[0].mxu0
        %v717 = vadd.f32 %v499, %v716
        %v718 = vpop.f32.mrb[0].mxu0
        %v719 = vadd.f32 %v503, %v718
        %v720 = vpop.f32.mrb[0].mxu0
        %v721 = vadd.f32 %v499, %v720
        %v722 = vpop.f32.mrb[0].mxu0
        %v723 = vadd.f32 %v503, %v722
        %724 = vmatprep.mubr.bf16.mxu0 0
        %725 = vmatmul.mubr.bf16.gmra.mrb[0].mxu0 %v571
        %v726 = vpop.f32.mrb[0].mxu0
        %v727 = vadd.f32 %v499, %v726
        %v728 = vpop.f32.mrb[0].mxu0
        %v729 = vadd.f32 %v503, %v728
        %v730 = vpop.f32.mrb[0].mxu0
        %v731 = vadd.f32 %v499, %v730
        %v732 = vpop.f32.mrb[0].mxu0
        %v733 = vadd.f32 %v503, %v732
        %734 = vmatprep.mubr.bf16.mxu0 0
        %735 = vmatmul.mubr.bf16.gmra.mrb[0].mxu0 %v572
        %v736 = vpop.f32.mrb[0].mxu0
        %v737 = vadd.f32 %v499, %v736
        %v738 = vpop.f32.mrb[0].mxu0
        %v739 = vadd.f32 %v503, %v738
        %v740 = vpop.f32.mrb[0].mxu0
        %v741 = vadd.f32 %v499, %v740
        %v742 = vpop.f32.mrb[0].mxu0
        %v743 = vadd.f32 %v503, %v742
        %744 = vmatprep.mubr.bf16.mxu0 0
        %745 = vmatmul.mubr.bf16.gmra.mrb[0].mxu0 %v573
        %v746 = vpop.f32.mrb[0].mxu0
        %v747 = vadd.f32 %v499, %v746
        %v748 = vpop.f32.mrb[0].mxu0
        %v749 = vadd.f32 %v503, %v748
        %v750 = vpop.f32.mrb[0].mxu0
        %v751 = vadd.f32 %v499, %v750
        %v752 = vpop.f32.mrb[0].mxu0
        %v753 = vadd.f32 %v503, %v752
        %754 = vmatprep.mubr.bf16.mxu0 0
        %755 = vmatmul.mubr.bf16.gmra.mrb[0].mxu0 %v574
        %v756 = vpop.f32.mrb[0].mxu0
        %v757 = vadd.f32 %v499, %v756
        %v758 = vpop.f32.mrb[0].mxu0
        %v759 = vadd.f32 %v503, %v758
        %v760 = vpop.f32.mrb[0].mxu0
        %v761 = vadd.f32 %v499, %v760
        %v762 = vpop.f32.mrb[0].mxu0
        %v763 = vadd.f32 %v503, %v762
        %764 = vmatprep.mubr.bf16.mxu0 0
        %765 = vmatmul.mubr.bf16.gmra.mrb[0].mxu0 %v575
        %v766 = vpop.f32.mrb[0].mxu0
        %v767 = vadd.f32 %v499, %v766
        %v768 = vpop.f32.mrb[0].mxu0
        %v769 = vadd.f32 %v503, %v768
        %v770 = vpop.f32.mrb[0].mxu0
        %v771 = vadd.f32 %v499, %v770
        %v772 = vpop.f32.mrb[0].mxu0
        %v773 = vadd.f32 %v503, %v772
        %774 = vmatprep.mubr.bf16.mxu0 0
        %775 = vmatmul.mubr.bf16.gmra.mrb[0].mxu0 %v576
        %v776 = vpop.f32.mrb[0].mxu0
        %v777 = vadd.f32 %v499, %v776
        %v778 = vpop.f32.mrb[0].mxu0
        %v779 = vadd.f32 %v503, %v778
        %v780 = vpop.f32.mrb[0].mxu0
        %v781 = vadd.f32 %v499, %v780
        %v782 = vpop.f32.mrb[0].mxu0
        %v783 = vadd.f32 %v503, %v782
        %784 = vmatprep.mubr.bf16.mxu0 0
        %785 = vmatmul.mubr.bf16.gmra.mrb[0].mxu0 %v577
        %v786 = vpop.f32.mrb[0].mxu0
        %v787 = vadd.f32 %v499, %v786
        %v788 = vpop.f32.mrb[0].mxu0
        %v789 = vadd.f32 %v503, %v788
        %v790 = vpop.f32.mrb[0].mxu0
        %v791 = vadd.f32 %v499, %v790
        %v792 = vpop.f32.mrb[0].mxu0
        %v793 = vadd.f32 %v503, %v792
        %794 = vmatprep.mubr.bf16.mxu0 0
        %795 = vmatmul.mubr.bf16.gmra.mrb[0].mxu0 %v578
        %v796 = vpop.f32.mrb[0].mxu0
        %v797 = vadd.f32 %v499, %v796
        %v798 = vpop.f32.mrb[0].mxu0
        %v799 = vadd.f32 %v503, %v798
        %v800 = vpop.f32.mrb[0].mxu0
        %v801 = vadd.f32 %v499, %v800
        %v802 = vpop.f32.mrb[0].mxu0
        %v803 = vadd.f32 %v503, %v802
        %804 = vmatprep.mubr.bf16.mxu0 0
        %805 = vmatmul.mubr.bf16.gmra.mrb[0].mxu0 %v579
        %v806 = vpop.f32.mrb[0].mxu0
        %v807 = vadd.f32 %v499, %v806
        %v808 = vpop.f32.mrb[0].mxu0
        %v809 = vadd.f32 %v503, %v808
        %v810 = vpop.f32.mrb[0].mxu0
        %v811 = vadd.f32 %v499, %v810
        %v812 = vpop.f32.mrb[0].mxu0
        %v813 = vadd.f32 %v503, %v812
        %814 = vmatprep.mubr.bf16.mxu0 0
        %815 = vmatmul.mubr.bf16.gmra.mrb[0].mxu0 %v580
        %v816 = vpop.f32.mrb[0].mxu0
        %v817 = vadd.f32 %v499, %v816
        %v818 = vpop.f32.mrb[0].mxu0
        %v819 = vadd.f32 %v503, %v818
        %v820 = vpop.f32.mrb[0].mxu0
        %v821 = vadd.f32 %v499, %v820
        %v822 = vpop.f32.mrb[0].mxu0
        %v823 = vadd.f32 %v503, %v822
        %824 = vmatprep.mubr.bf16.mxu0 0
        %825 = vmatmul.mubr.bf16.gmra.mrb[0].mxu0 %v581
        %v826 = vpop.f32.mrb[0].mxu0
        %v827 = vadd.f32 %v499, %v826
        %v828 = vpop.f32.mrb[0].mxu0
        %v829 = vadd.f32 %v503, %v828
        %v830 = vpop.f32.mrb[0].mxu0
        %v831 = vadd.f32 %v499, %v830
        %v832 = vpop.f32.mrb[0].mxu0
        %v833 = vadd.f32 %v503, %v832
        %834 = vmatprep.mubr.bf16.mxu0 0
        %835 = vmatmul.mubr.bf16.gmra.mrb[0].mxu0 %v582
        %v836 = vpop.f32.mrb[0].mxu0
        %v837 = vadd.f32 %v499, %v836
        %v838 = vpop.f32.mrb[0].mxu0
        %v839 = vadd.f32 %v503, %v838
        %v840 = vpop.f32.mrb[0].mxu0
        %v841 = vadd.f32 %v499, %v840
        %v842 = vpop.f32.mrb[0].mxu0
        %v843 = vadd.f32 %v503, %v842
        %844 = vmatprep.mubr.bf16.mxu0 0
        %845 = vmatmul.mubr.bf16.gmra.mrb[0].mxu0 %v583
        %v846 = vpop.f32.mrb[0].mxu0
        %v847 = vadd.f32 %v499, %v846
        %v848 = vpop.f32.mrb[0].mxu0
        %v849 = vadd.f32 %v503, %v848
        %v850 = vpop.f32.mrb[0].mxu0
        %v851 = vadd.f32 %v499, %v850
        %v852 = vpop.f32.mrb[0].mxu0
        %v853 = vadd.f32 %v503, %v852
        %854 = vmatprep.mubr.bf16.mxu0 0
        %855 = vmatmul.mubr.bf16.gmra.mrb[0].mxu0 %v584
        %v856 = vpop.f32.mrb[0].mxu0
        %v857 = vadd.f32 %v499, %v856
        %v858 = vpop.f32.mrb[0].mxu0
        %v859 = vadd.f32 %v503, %v858
        %v860 = vpop.f32.mrb[0].mxu0
        %v861 = vadd.f32 %v499, %v860
        %v862 = vpop.f32.mrb[0].mxu0
        %v863 = vadd.f32 %v503, %v862
        %864 = vmatprep.mubr.bf16.mxu0 0
        %865 = vmatmul.mubr.bf16.gmra.mrb[0].mxu0 %v585
        %v866 = vpop.f32.mrb[0].mxu0
        %v867 = vadd.f32 %v499, %v866
        %v868 = vpop.f32.mrb[0].mxu0
        %v869 = vadd.f32 %v503, %v868
        %v870 = vpop.f32.mrb[0].mxu0
        %v871 = vadd.f32 %v499, %v870
        %v872 = vpop.f32.mrb[0].mxu0
        %v873 = vadd.f32 %v503, %v872
        %874 = vdwg.mxu0
        %875 = vst [vmem:[%s356] sm:$0xff] %v717
        %876 = vst [vmem:[%s356 + $0x8] sm:$0xff] %v719
        %877 = vst [vmem:[%s356 + $0x10] sm:$0xff] %v721
        %878 = vst [vmem:[%s356 + $0x18] sm:$0xff] %v723
        %879 = vst [vmem:[%s356 + $0x20] sm:$0xff] %v727
        %880 = vst [vmem:[%s356 + $0x28] sm:$0xff] %v729
        %881 = vst [vmem:[%s356 + $0x30] sm:$0xff] %v731
        %882 = vst [vmem:[%s356 + $0x38] sm:$0xff] %v733
        %883 = vst [vmem:[%s356 + $0x40] sm:$0xff] %v737
        %884 = vst [vmem:[%s356 + $0x48] sm:$0xff] %v739
        %885 = vst [vmem:[%s356 + $0x50] sm:$0xff] %v741
        %886 = vst [vmem:[%s356 + $0x58] sm:$0xff] %v743
        %887 = vst [vmem:[%s356 + $0x60] sm:$0xff] %v747
        %888 = vst [vmem:[%s356 + $0x68] sm:$0xff] %v749
        %889 = vst [vmem:[%s356 + $0x70] sm:$0xff] %v751
        %890 = vst [vmem:[%s356 + $0x78] sm:$0xff] %v753
        %891 = vst [vmem:[%s356 + $0x80] sm:$0xff] %v757
        %892 = vst [vmem:[%s356 + $0x88] sm:$0xff] %v759
        %893 = vst [vmem:[%s356 + $0x90] sm:$0xff] %v761
        %894 = vst [vmem:[%s356 + $0x98] sm:$0xff] %v763
        %895 = vst [vmem:[%s356 + $0xa0] sm:$0xff] %v767
        %896 = vst [vmem:[%s356 + $0xa8] sm:$0xff] %v769
        %897 = vst [vmem:[%s356 + $0xb0] sm:$0xff] %v771
        %898 = vst [vmem:[%s356 + $0xb8] sm:$0xff] %v773
        %899 = vst [vmem:[%s356 + $0xc0] sm:$0xff] %v777
        %900 = vst [vmem:[%s356 + $0xc8] sm:$0xff] %v779
        %901 = vst [vmem:[%s356 + $0xd0] sm:$0xff] %v781
        %902 = vst [vmem:[%s356 + $0xd8] sm:$0xff] %v783
        %903 = vst [vmem:[%s356 + $0xe0] sm:$0xff] %v787
        %904 = vst [vmem:[%s356 + $0xe8] sm:$0xff] %v789
        %905 = vst [vmem:[%s356 + $0xf0] sm:$0xff] %v791
        %906 = vst [vmem:[%s356 + $0xf8] sm:$0xff] %v793
        %907 = vst [vmem:[%s356 + $0x100] sm:$0xff] %v797
        %908 = vst [vmem:[%s356 + $0x108] sm:$0xff] %v799
        %909 = vst [vmem:[%s356 + $0x110] sm:$0xff] %v801
        %910 = vst [vmem:[%s356 + $0x118] sm:$0xff] %v803
        %911 = vst [vmem:[%s356 + $0x120] sm:$0xff] %v807
        %912 = vst [vmem:[%s356 + $0x128] sm:$0xff] %v809
        %913 = vst [vmem:[%s356 + $0x130] sm:$0xff] %v811
        %914 = vst [vmem:[%s356 + $0x138] sm:$0xff] %v813
        %915 = vst [vmem:[%s356 + $0x140] sm:$0xff] %v817
        %916 = vst [vmem:[%s356 + $0x148] sm:$0xff] %v819
        %917 = vst [vmem:[%s356 + $0x150] sm:$0xff] %v821
        %918 = vst [vmem:[%s356 + $0x158] sm:$0xff] %v823
        %919 = vst [vmem:[%s356 + $0x160] sm:$0xff] %v827
        %920 = vst [vmem:[%s356 + $0x168] sm:$0xff] %v829
        %921 = vst [vmem:[%s356 + $0x170] sm:$0xff] %v831
        %922 = vst [vmem:[%s356 + $0x178] sm:$0xff] %v833
        %923 = vst [vmem:[%s356 + $0x180] sm:$0xff] %v837
        %924 = vst [vmem:[%s356 + $0x188] sm:$0xff] %v839
        %925 = vst [vmem:[%s356 + $0x190] sm:$0xff] %v841
        %926 = vst [vmem:[%s356 + $0x198] sm:$0xff] %v843
        %927 = vst [vmem:[%s356 + $0x1a0] sm:$0xff] %v847
        %928 = vst [vmem:[%s356 + $0x1a8] sm:$0xff] %v849
        %929 = vst [vmem:[%s356 + $0x1b0] sm:$0xff] %v851
        %930 = vst [vmem:[%s356 + $0x1b8] sm:$0xff] %v853
        %931 = vst [vmem:[%s356 + $0x1c0] sm:$0xff] %v857
        %932 = vst [vmem:[%s356 + $0x1c8] sm:$0xff] %v859
        %933 = vst [vmem:[%s356 + $0x1d0] sm:$0xff] %v861
        %934 = vst [vmem:[%s356 + $0x1d8] sm:$0xff] %v863
        %935 = vst [vmem:[%s356 + $0x1e0] sm:$0xff] %v867
        %936 = vst [vmem:[%s356 + $0x1e8] sm:$0xff] %v869
        %937 = vst [vmem:[%s356 + $0x1f0] sm:$0xff] %v871
        %938 = vst [vmem:[%s356 + $0x1f8] sm:$0xff] %v873
        %v939 = vmax.f32 %v717, 0.0
        %v940 = vmax.f32 %v719, 0.0
        %v941 = vmax.f32 %v721, 0.0
        %v942 = vmax.f32 %v723, 0.0
        %v943 = vmax.f32 %v727, 0.0
        %v944 = vmax.f32 %v729, 0.0
        %v945 = vmax.f32 %v731, 0.0
        %v946 = vmax.f32 %v733, 0.0
        %v947 = vmax.f32 %v737, 0.0
        %v948 = vmax.f32 %v739, 0.0
        %v949 = vmax.f32 %v741, 0.0
        %v950 = vmax.f32 %v743, 0.0
        %v951 = vmax.f32 %v747, 0.0
        %v952 = vmax.f32 %v749, 0.0
        %v953 = vmax.f32 %v751, 0.0
        %v954 = vmax.f32 %v753, 0.0
        %v955 = vmax.f32 %v757, 0.0
        %v956 = vmax.f32 %v759, 0.0
        %v957 = vmax.f32 %v761, 0.0
        %v958 = vmax.f32 %v763, 0.0
        %v959 = vmax.f32 %v767, 0.0
        %v960 = vmax.f32 %v769, 0.0
        %v961 = vmax.f32 %v771, 0.0
        %v962 = vmax.f32 %v773, 0.0
        %v963 = vmax.f32 %v777, 0.0
        %v964 = vmax.f32 %v779, 0.0
        %v965 = vmax.f32 %v781, 0.0
        %v966 = vmax.f32 %v783, 0.0
        %v967 = vmax.f32 %v787, 0.0
        %v968 = vmax.f32 %v789, 0.0
        %v969 = vmax.f32 %v791, 0.0
        %v970 = vmax.f32 %v793, 0.0
        %v971 = vmax.f32 %v797, 0.0
        %v972 = vmax.f32 %v799, 0.0
        %v973 = vmax.f32 %v801, 0.0
        %v974 = vmax.f32 %v803, 0.0
        %v975 = vmax.f32 %v807, 0.0
        %v976 = vmax.f32 %v809, 0.0
        %v977 = vmax.f32 %v811, 0.0
        %v978 = vmax.f32 %v813, 0.0
        %v979 = vmax.f32 %v817, 0.0
        %v980 = vmax.f32 %v819, 0.0
        %v981 = vmax.f32 %v821, 0.0
        %v982 = vmax.f32 %v823, 0.0
        %v983 = vmax.f32 %v827, 0.0
        %v984 = vmax.f32 %v829, 0.0
        %v985 = vmax.f32 %v831, 0.0
        %v986 = vmax.f32 %v833, 0.0
        %v987 = vmax.f32 %v837, 0.0
        %v988 = vmax.f32 %v839, 0.0
        %v989 = vmax.f32 %v841, 0.0
        %v990 = vmax.f32 %v843, 0.0
        %v991 = vmax.f32 %v847, 0.0
        %v992 = vmax.f32 %v849, 0.0
        %v993 = vmax.f32 %v851, 0.0
        %v994 = vmax.f32 %v853, 0.0
        %v995 = vmax.f32 %v857, 0.0
        %v996 = vmax.f32 %v859, 0.0
        %v997 = vmax.f32 %v861, 0.0
        %v998 = vmax.f32 %v863, 0.0
        %v999 = vmax.f32 %v867, 0.0
        %v1000 = vmax.f32 %v869, 0.0
        %v1001 = vmax.f32 %v871, 0.0
        %v1002 = vmax.f32 %v873, 0.0
        %v1003 = vpack.c.bf16 %v941, %v939
        %v1004 = vpack.c.bf16 %v942, %v940
        %v1005 = vpack.c.bf16 %v945, %v943
        %v1006 = vpack.c.bf16 %v946, %v944
        %v1007 = vpack.c.bf16 %v949, %v947
        %v1008 = vpack.c.bf16 %v950, %v948
        %v1009 = vpack.c.bf16 %v953, %v951
        %v1010 = vpack.c.bf16 %v954, %v952
        %v1011 = vpack.c.bf16 %v957, %v955
        %v1012 = vpack.c.bf16 %v958, %v956
        %v1013 = vpack.c.bf16 %v961, %v959
        %v1014 = vpack.c.bf16 %v962, %v960
        %v1015 = vpack.c.bf16 %v965, %v963
        %v1016 = vpack.c.bf16 %v966, %v964
        %v1017 = vpack.c.bf16 %v969, %v967
        %v1018 = vpack.c.bf16 %v970, %v968
        %v1019 = vpack.c.bf16 %v973, %v971
        %v1020 = vpack.c.bf16 %v974, %v972
        %v1021 = vpack.c.bf16 %v977, %v975
        %v1022 = vpack.c.bf16 %v978, %v976
        %v1023 = vpack.c.bf16 %v981, %v979
        %v1024 = vpack.c.bf16 %v982, %v980
        %v1025 = vpack.c.bf16 %v985, %v983
        %v1026 = vpack.c.bf16 %v986, %v984
        %v1027 = vpack.c.bf16 %v989, %v987
        %v1028 = vpack.c.bf16 %v990, %v988
        %v1029 = vpack.c.bf16 %v993, %v991
        %v1030 = vpack.c.bf16 %v994, %v992
        %v1031 = vpack.c.bf16 %v997, %v995
        %v1032 = vpack.c.bf16 %v998, %v996
        %v1033 = vpack.c.bf16 %v1001, %v999
        %v1034 = vpack.c.bf16 %v1002, %v1000
        %v1036 = vlaneseq
        %v1037 = vshrl.u32 %v1036, 7
        %v1038 = vsub.s32 0, %v1037
        %v1039 = vrot.slane %v494, %v1038
        %v1073 = vunpack.c.l.b16 %v462
        %v1074 = vunpack.c.l.b16 %v463
        %v1075 = vunpack.c.l.b16 %v464
        %v1076 = vunpack.c.l.b16 %v465
        %v1077 = vunpack.c.l.b16 %v466
        %v1078 = vunpack.c.l.b16 %v467
        %v1079 = vunpack.c.l.b16 %v468
        %v1080 = vunpack.c.l.b16 %v469
        %v1081 = vunpack.c.l.b16 %v470
        %v1082 = vunpack.c.l.b16 %v471
        %v1083 = vunpack.c.l.b16 %v472
        %v1084 = vunpack.c.l.b16 %v473
        %v1085 = vunpack.c.l.b16 %v474
        %v1086 = vunpack.c.l.b16 %v475
        %v1087 = vunpack.c.l.b16 %v476
        %v1088 = vunpack.c.l.b16 %v477
        %v1089 = vunpack.c.l.b16 %v478
        %v1090 = vunpack.c.l.b16 %v479
        %v1091 = vunpack.c.l.b16 %v480
        %v1092 = vunpack.c.l.b16 %v481
        %v1093 = vunpack.c.l.b16 %v482
        %v1094 = vunpack.c.l.b16 %v483
        %v1095 = vunpack.c.l.b16 %v484
        %v1096 = vunpack.c.l.b16 %v485
        %v1097 = vunpack.c.l.b16 %v486
        %v1098 = vunpack.c.l.b16 %v487
        %v1099 = vunpack.c.l.b16 %v488
        %v1100 = vunpack.c.l.b16 %v489
        %v1101 = vunpack.c.l.b16 %v490
        %v1102 = vunpack.c.l.b16 %v491
        %v1103 = vunpack.c.l.b16 %v492
        %v1104 = vunpack.c.l.b16 %v493
        %v1105 = vpack.c.b16 %v1074, %v1073
        %v1106 = vpack.c.b16 %v1076, %v1075
        %v1107 = vpack.c.b16 %v1078, %v1077
        %v1108 = vpack.c.b16 %v1080, %v1079
        %v1109 = vpack.c.b16 %v1082, %v1081
        %v1110 = vpack.c.b16 %v1084, %v1083
        %v1111 = vpack.c.b16 %v1086, %v1085
        %v1112 = vpack.c.b16 %v1088, %v1087
        %v1113 = vpack.c.b16 %v1090, %v1089
        %v1114 = vpack.c.b16 %v1092, %v1091
        %v1115 = vpack.c.b16 %v1094, %v1093
        %v1116 = vpack.c.b16 %v1096, %v1095
        %v1117 = vpack.c.b16 %v1098, %v1097
        %v1118 = vpack.c.b16 %v1100, %v1099
        %v1119 = vpack.c.b16 %v1102, %v1101
        %v1120 = vpack.c.b16 %v1104, %v1103
        %1137 = vmatprep.subr.bf16.mxu0 0
        %1138 = vmatpush1.bf16.msra.mxu0 %v1105
        %1139 = vmatprep.subr.bf16.mxu0 0
        %1140 = vmatpush1.bf16.msra.mxu0 %v1106
        %1141 = vmatprep.subr.bf16.mxu0 0
        %1142 = vmatpush1.bf16.msra.mxu0 %v1107
        %1143 = vmatprep.subr.bf16.mxu0 0
        %1144 = vmatpush1.bf16.msra.mxu0 %v1108
        %1145 = vmatprep.subr.bf16.mxu0 0
        %1146 = vmatpush1.bf16.msra.mxu0 %v1109
        %1147 = vmatprep.subr.bf16.mxu0 0
        %1148 = vmatpush1.bf16.msra.mxu0 %v1110
        %1149 = vmatprep.subr.bf16.mxu0 0
        %1150 = vmatpush1.bf16.msra.mxu0 %v1111
        %1151 = vmatprep.subr.bf16.mxu0 0
        %1152 = vmatpush1.bf16.msra.mxu0 %v1112
        %1153 = vmatprep.subr.bf16.mxu0 0
        %1154 = vmatpush1.bf16.msra.mxu0 %v1113
        %1155 = vmatprep.subr.bf16.mxu0 0
        %1156 = vmatpush1.bf16.msra.mxu0 %v1114
        %1157 = vmatprep.subr.bf16.mxu0 0
        %1158 = vmatpush1.bf16.msra.mxu0 %v1115
        %1159 = vmatprep.subr.bf16.mxu0 0
        %1160 = vmatpush1.bf16.msra.mxu0 %v1116
        %1161 = vmatprep.subr.bf16.mxu0 0
        %1162 = vmatpush1.bf16.msra.mxu0 %v1117
        %1163 = vmatprep.subr.bf16.mxu0 0
        %1164 = vmatpush1.bf16.msra.mxu0 %v1118
        %1165 = vmatprep.subr.bf16.mxu0 0
        %1166 = vmatpush1.bf16.msra.mxu0 %v1119
        %1167 = vmatprep.subr.bf16.mxu0 0
        %1168 = vmatpush1.bf16.msra.mxu0 %v1120
        %1169 = vmatprep.mubr.bf16.mxu0 %v1004
        %1170 = vmatmul.mubr.bf16.gmra.mrb[0].mxu0 %v1003
        %v1171 = vpop.f32.mrb[0].mxu0
        %v1172 = vadd.f32 %v1039, %v1171
        %v1173 = vpop.f32.mrb[0].mxu0
        %v1174 = vpop.f32.mrb[0].mxu0
        %v1175 = vadd.f32 %v1039, %v1174
        %v1176 = vpop.f32.mrb[0].mxu0
        %1177 = vmatprep.mubr.bf16.mxu0 %v1006
        %1178 = vmatmul.mubr.bf16.gmra.mrb[0].mxu0 %v1005
        %v1179 = vpop.f32.mrb[0].mxu0
        %v1180 = vadd.f32 %v1039, %v1179
        %v1181 = vpop.f32.mrb[0].mxu0
        %v1182 = vpop.f32.mrb[0].mxu0
        %v1183 = vadd.f32 %v1039, %v1182
        %v1184 = vpop.f32.mrb[0].mxu0
        %1185 = vmatprep.mubr.bf16.mxu0 %v1008
        %1186 = vmatmul.mubr.bf16.gmra.mrb[0].mxu0 %v1007
        %v1187 = vpop.f32.mrb[0].mxu0
        %v1188 = vadd.f32 %v1039, %v1187
        %v1189 = vpop.f32.mrb[0].mxu0
        %v1190 = vpop.f32.mrb[0].mxu0
        %v1191 = vadd.f32 %v1039, %v1190
        %v1192 = vpop.f32.mrb[0].mxu0
        %1193 = vmatprep.mubr.bf16.mxu0 %v1010
        %1194 = vmatmul.mubr.bf16.gmra.mrb[0].mxu0 %v1009
        %v1195 = vpop.f32.mrb[0].mxu0
        %v1196 = vadd.f32 %v1039, %v1195
        %v1197 = vpop.f32.mrb[0].mxu0
        %v1198 = vpop.f32.mrb[0].mxu0
        %v1199 = vadd.f32 %v1039, %v1198
        %v1200 = vpop.f32.mrb[0].mxu0
        %1201 = vmatprep.mubr.bf16.mxu0 %v1012
        %1202 = vmatmul.mubr.bf16.gmra.mrb[0].mxu0 %v1011
        %v1203 = vpop.f32.mrb[0].mxu0
        %v1204 = vadd.f32 %v1039, %v1203
        %v1205 = vpop.f32.mrb[0].mxu0
        %v1206 = vpop.f32.mrb[0].mxu0
        %v1207 = vadd.f32 %v1039, %v1206
        %v1208 = vpop.f32.mrb[0].mxu0
        %1209 = vmatprep.mubr.bf16.mxu0 %v1014
        %1210 = vmatmul.mubr.bf16.gmra.mrb[0].mxu0 %v1013
        %v1211 = vpop.f32.mrb[0].mxu0
        %v1212 = vadd.f32 %v1039, %v1211
        %v1213 = vpop.f32.mrb[0].mxu0
        %v1214 = vpop.f32.mrb[0].mxu0
        %v1215 = vadd.f32 %v1039, %v1214
        %v1216 = vpop.f32.mrb[0].mxu0
        %1217 = vmatprep.mubr.bf16.mxu0 %v1016
        %1218 = vmatmul.mubr.bf16.gmra.mrb[0].mxu0 %v1015
        %v1219 = vpop.f32.mrb[0].mxu0
        %v1220 = vadd.f32 %v1039, %v1219
        %v1221 = vpop.f32.mrb[0].mxu0
        %v1222 = vpop.f32.mrb[0].mxu0
        %v1223 = vadd.f32 %v1039, %v1222
        %v1224 = vpop.f32.mrb[0].mxu0
        %1225 = vmatprep.mubr.bf16.mxu0 %v1018
        %1226 = vmatmul.mubr.bf16.gmra.mrb[0].mxu0 %v1017
        %v1227 = vpop.f32.mrb[0].mxu0
        %v1228 = vadd.f32 %v1039, %v1227
        %v1229 = vpop.f32.mrb[0].mxu0
        %v1230 = vpop.f32.mrb[0].mxu0
        %v1231 = vadd.f32 %v1039, %v1230
        %v1232 = vpop.f32.mrb[0].mxu0
        %1233 = vmatprep.mubr.bf16.mxu0 %v1020
        %1234 = vmatmul.mubr.bf16.gmra.mrb[0].mxu0 %v1019
        %v1235 = vpop.f32.mrb[0].mxu0
        %v1236 = vadd.f32 %v1039, %v1235
        %v1237 = vpop.f32.mrb[0].mxu0
        %v1238 = vpop.f32.mrb[0].mxu0
        %v1239 = vadd.f32 %v1039, %v1238
        %v1240 = vpop.f32.mrb[0].mxu0
        %1241 = vmatprep.mubr.bf16.mxu0 %v1022
        %1242 = vmatmul.mubr.bf16.gmra.mrb[0].mxu0 %v1021
        %v1243 = vpop.f32.mrb[0].mxu0
        %v1244 = vadd.f32 %v1039, %v1243
        %v1245 = vpop.f32.mrb[0].mxu0
        %v1246 = vpop.f32.mrb[0].mxu0
        %v1247 = vadd.f32 %v1039, %v1246
        %v1248 = vpop.f32.mrb[0].mxu0
        %1249 = vmatprep.mubr.bf16.mxu0 %v1024
        %1250 = vmatmul.mubr.bf16.gmra.mrb[0].mxu0 %v1023
        %v1251 = vpop.f32.mrb[0].mxu0
        %v1252 = vadd.f32 %v1039, %v1251
        %v1253 = vpop.f32.mrb[0].mxu0
        %v1254 = vpop.f32.mrb[0].mxu0
        %v1255 = vadd.f32 %v1039, %v1254
        %v1256 = vpop.f32.mrb[0].mxu0
        %1257 = vmatprep.mubr.bf16.mxu0 %v1026
        %1258 = vmatmul.mubr.bf16.gmra.mrb[0].mxu0 %v1025
        %v1259 = vpop.f32.mrb[0].mxu0
        %v1260 = vadd.f32 %v1039, %v1259
        %v1261 = vpop.f32.mrb[0].mxu0
        %v1262 = vpop.f32.mrb[0].mxu0
        %v1263 = vadd.f32 %v1039, %v1262
        %v1264 = vpop.f32.mrb[0].mxu0
        %1265 = vmatprep.mubr.bf16.mxu0 %v1028
        %1266 = vmatmul.mubr.bf16.gmra.mrb[0].mxu0 %v1027
        %v1267 = vpop.f32.mrb[0].mxu0
        %v1268 = vadd.f32 %v1039, %v1267
        %v1269 = vpop.f32.mrb[0].mxu0
        %v1270 = vpop.f32.mrb[0].mxu0
        %v1271 = vadd.f32 %v1039, %v1270
        %v1272 = vpop.f32.mrb[0].mxu0
        %1273 = vmatprep.mubr.bf16.mxu0 %v1030
        %1274 = vmatmul.mubr.bf16.gmra.mrb[0].mxu0 %v1029
        %v1275 = vpop.f32.mrb[0].mxu0
        %v1276 = vadd.f32 %v1039, %v1275
        %v1277 = vpop.f32.mrb[0].mxu0
        %v1278 = vpop.f32.mrb[0].mxu0
        %v1279 = vadd.f32 %v1039, %v1278
        %v1280 = vpop.f32.mrb[0].mxu0
        %1281 = vmatprep.mubr.bf16.mxu0 %v1032
        %1282 = vmatmul.mubr.bf16.gmra.mrb[0].mxu0 %v1031
        %v1283 = vpop.f32.mrb[0].mxu0
        %v1284 = vadd.f32 %v1039, %v1283
        %v1285 = vpop.f32.mrb[0].mxu0
        %v1286 = vpop.f32.mrb[0].mxu0
        %v1287 = vadd.f32 %v1039, %v1286
        %v1288 = vpop.f32.mrb[0].mxu0
        %1289 = vmatprep.mubr.bf16.mxu0 %v1034
        %1290 = vmatmul.mubr.bf16.gmra.mrb[0].mxu0 %v1033
        %v1291 = vpop.f32.mrb[0].mxu0
        %v1292 = vadd.f32 %v1039, %v1291
        %v1293 = vpop.f32.mrb[0].mxu0
        %v1294 = vpop.f32.mrb[0].mxu0
        %v1295 = vadd.f32 %v1039, %v1294
        %v1296 = vpop.f32.mrb[0].mxu0
        %1297 = vdwg.mxu0
        %1298 = vst [vmem:[%s363] sm:$0xff] %v1172
        %1299 = vst [vmem:[%s363 + $0x8] sm:$0xff] %v1175
        %1300 = vst [vmem:[%s363 + $0x10] sm:$0xff] %v1180
        %1301 = vst [vmem:[%s363 + $0x18] sm:$0xff] %v1183
        %1302 = vst [vmem:[%s363 + $0x20] sm:$0xff] %v1188
        %1303 = vst [vmem:[%s363 + $0x28] sm:$0xff] %v1191
        %1304 = vst [vmem:[%s363 + $0x30] sm:$0xff] %v1196
        %1305 = vst [vmem:[%s363 + $0x38] sm:$0xff] %v1199
        %1306 = vst [vmem:[%s363 + $0x40] sm:$0xff] %v1204
        %1307 = vst [vmem:[%s363 + $0x48] sm:$0xff] %v1207
        %1308 = vst [vmem:[%s363 + $0x50] sm:$0xff] %v1212
        %1309 = vst [vmem:[%s363 + $0x58] sm:$0xff] %v1215
        %1310 = vst [vmem:[%s363 + $0x60] sm:$0xff] %v1220
        %1311 = vst [vmem:[%s363 + $0x68] sm:$0xff] %v1223
        %1312 = vst [vmem:[%s363 + $0x70] sm:$0xff] %v1228
        %1313 = vst [vmem:[%s363 + $0x78] sm:$0xff] %v1231
        %1314 = vst [vmem:[%s363 + $0x80] sm:$0xff] %v1236
        %1315 = vst [vmem:[%s363 + $0x88] sm:$0xff] %v1239
        %1316 = vst [vmem:[%s363 + $0x90] sm:$0xff] %v1244
        %1317 = vst [vmem:[%s363 + $0x98] sm:$0xff] %v1247
        %1318 = vst [vmem:[%s363 + $0xa0] sm:$0xff] %v1252
        %1319 = vst [vmem:[%s363 + $0xa8] sm:$0xff] %v1255
        %1320 = vst [vmem:[%s363 + $0xb0] sm:$0xff] %v1260
        %1321 = vst [vmem:[%s363 + $0xb8] sm:$0xff] %v1263
        %1322 = vst [vmem:[%s363 + $0xc0] sm:$0xff] %v1268
        %1323 = vst [vmem:[%s363 + $0xc8] sm:$0xff] %v1271
        %1324 = vst [vmem:[%s363 + $0xd0] sm:$0xff] %v1276
        %1325 = vst [vmem:[%s363 + $0xd8] sm:$0xff] %v1279
        %1326 = vst [vmem:[%s363 + $0xe0] sm:$0xff] %v1284
        %1327 = vst [vmem:[%s363 + $0xe8] sm:$0xff] %v1287
        %1328 = vst [vmem:[%s363 + $0xf0] sm:$0xff] %v1292
        %1329 = vst [vmem:[%s363 + $0xf8] sm:$0xff] %v1295
        %v1330 = vld [vmem:[#allocation2] sm:$0x3]
        %v1331 = vand.u32 2147483647, %v717
        %v1332 = vand.u32 2147483647, %v719
        %v1333 = vand.u32 2147483647, %v721
        %v1334 = vand.u32 2147483647, %v723
        %v1335 = vand.u32 2147483647, %v727
        %v1336 = vand.u32 2147483647, %v729
        %v1337 = vand.u32 2147483647, %v731
        %v1338 = vand.u32 2147483647, %v733
        %v1339 = vand.u32 2147483647, %v737
        %v1340 = vand.u32 2147483647, %v739
        %v1341 = vand.u32 2147483647, %v741
        %v1342 = vand.u32 2147483647, %v743
        %v1343 = vand.u32 2147483647, %v747
        %v1344 = vand.u32 2147483647, %v749
        %v1345 = vand.u32 2147483647, %v751
        %v1346 = vand.u32 2147483647, %v753
        %v1347 = vand.u32 2147483647, %v757
        %v1348 = vand.u32 2147483647, %v759
        %v1349 = vand.u32 2147483647, %v761
        %v1350 = vand.u32 2147483647, %v763
        %v1351 = vand.u32 2147483647, %v767
        %v1352 = vand.u32 2147483647, %v769
        %v1353 = vand.u32 2147483647, %v771
        %v1354 = vand.u32 2147483647, %v773
        %v1355 = vand.u32 2147483647, %v777
        %v1356 = vand.u32 2147483647, %v779
        %v1357 = vand.u32 2147483647, %v781
        %v1358 = vand.u32 2147483647, %v783
        %v1359 = vand.u32 2147483647, %v787
        %v1360 = vand.u32 2147483647, %v789
        %v1361 = vand.u32 2147483647, %v791
        %v1362 = vand.u32 2147483647, %v793
        %v1363 = vand.u32 2147483647, %v797
        %v1364 = vand.u32 2147483647, %v799
        %v1365 = vand.u32 2147483647, %v801
        %v1366 = vand.u32 2147483647, %v803
        %v1367 = vand.u32 2147483647, %v807
        %v1368 = vand.u32 2147483647, %v809
        %v1369 = vand.u32 2147483647, %v811
        %v1370 = vand.u32 2147483647, %v813
        %v1371 = vand.u32 2147483647, %v817
        %v1372 = vand.u32 2147483647, %v819
        %v1373 = vand.u32 2147483647, %v821
        %v1374 = vand.u32 2147483647, %v823
        %v1375 = vand.u32 2147483647, %v827
        %v1376 = vand.u32 2147483647, %v829
        %v1377 = vand.u32 2147483647, %v831
        %v1378 = vand.u32 2147483647, %v833
        %v1379 = vand.u32 2147483647, %v837
        %v1380 = vand.u32 2147483647, %v839
        %v1381 = vand.u32 2147483647, %v841
        %v1382 = vand.u32 2147483647, %v843
        %v1383 = vand.u32 2147483647, %v847
        %v1384 = vand.u32 2147483647, %v849
        %v1385 = vand.u32 2147483647, %v851
        %v1386 = vand.u32 2147483647, %v853
        %v1387 = vand.u32 2147483647, %v857
        %v1388 = vand.u32 2147483647, %v859
        %v1389 = vand.u32 2147483647, %v861
        %v1390 = vand.u32 2147483647, %v863
        %v1391 = vand.u32 2147483647, %v867
        %v1392 = vand.u32 2147483647, %v869
        %v1393 = vand.u32 2147483647, %v871
        %v1394 = vand.u32 2147483647, %v873
        %v1395 = vadd.f32 %v1331, %v1333
        %v1396 = vadd.f32 %v1395, %v1335
        %v1397 = vadd.f32 %v1396, %v1337
        %v1398 = vadd.f32 %v1397, %v1339
        %v1399 = vadd.f32 %v1398, %v1341
        %v1400 = vadd.f32 %v1399, %v1343
        %v1401 = vadd.f32 %v1400, %v1345
        %v1402 = vadd.f32 %v1401, %v1347
        %v1403 = vadd.f32 %v1402, %v1349
        %v1404 = vadd.f32 %v1403, %v1351
        %v1405 = vadd.f32 %v1404, %v1353
        %v1406 = vadd.f32 %v1405, %v1355
        %v1407 = vadd.f32 %v1406, %v1357
        %v1408 = vadd.f32 %v1407, %v1359
        %v1409 = vadd.f32 %v1408, %v1361
        %v1410 = vadd.f32 %v1409, %v1363
        %v1411 = vadd.f32 %v1410, %v1365
        %v1412 = vadd.f32 %v1411, %v1367
        %v1413 = vadd.f32 %v1412, %v1369
        %v1414 = vadd.f32 %v1413, %v1371
        %v1415 = vadd.f32 %v1414, %v1373
        %v1416 = vadd.f32 %v1415, %v1375
        %v1417 = vadd.f32 %v1416, %v1377
        %v1418 = vadd.f32 %v1417, %v1379
        %v1419 = vadd.f32 %v1418, %v1381
        %v1420 = vadd.f32 %v1419, %v1383
        %v1421 = vadd.f32 %v1420, %v1385
        %v1422 = vadd.f32 %v1421, %v1387
        %v1423 = vadd.f32 %v1422, %v1389
        %v1424 = vadd.f32 %v1423, %v1391
        %v1425 = vadd.f32 %v1424, %v1393
        %v1426 = vrot.slane %v1425, 4
        %v1427 = vadd.f32 %v1425, %v1426
        %v1428 = vrot.slane %v1427, 2
        %v1429 = vadd.f32 %v1427, %v1428
        %v1430 = vrot.slane %v1429, 1
        %v1431 = vadd.f32 %v1429, %v1430
        %v1432 = vadd.f32 %v1332, %v1334
        %v1433 = vadd.f32 %v1432, %v1336
        %v1434 = vadd.f32 %v1433, %v1338
        %v1435 = vadd.f32 %v1434, %v1340
        %v1436 = vadd.f32 %v1435, %v1342
        %v1437 = vadd.f32 %v1436, %v1344
        %v1438 = vadd.f32 %v1437, %v1346
        %v1439 = vadd.f32 %v1438, %v1348
        %v1440 = vadd.f32 %v1439, %v1350
        %v1441 = vadd.f32 %v1440, %v1352
        %v1442 = vadd.f32 %v1441, %v1354
        %v1443 = vadd.f32 %v1442, %v1356
        %v1444 = vadd.f32 %v1443, %v1358
        %v1445 = vadd.f32 %v1444, %v1360
        %v1446 = vadd.f32 %v1445, %v1362
        %v1447 = vadd.f32 %v1446, %v1364
        %v1448 = vadd.f32 %v1447, %v1366
        %v1449 = vadd.f32 %v1448, %v1368
        %v1450 = vadd.f32 %v1449, %v1370
        %v1451 = vadd.f32 %v1450, %v1372
        %v1452 = vadd.f32 %v1451, %v1374
        %v1453 = vadd.f32 %v1452, %v1376
        %v1454 = vadd.f32 %v1453, %v1378
        %v1455 = vadd.f32 %v1454, %v1380
        %v1456 = vadd.f32 %v1455, %v1382
        %v1457 = vadd.f32 %v1456, %v1384
        %v1458 = vadd.f32 %v1457, %v1386
        %v1459 = vadd.f32 %v1458, %v1388
        %v1460 = vadd.f32 %v1459, %v1390
        %v1461 = vadd.f32 %v1460, %v1392
        %v1462 = vadd.f32 %v1461, %v1394
        %v1463 = vrot.slane %v1462, 4
        %v1464 = vadd.f32 %v1462, %v1463
        %v1465 = vrot.slane %v1464, 2
        %v1466 = vadd.f32 %v1464, %v1465
        %v1467 = vrot.slane %v1466, 1
        %v1468 = vadd.f32 %v1466, %v1467
        %v1471 = vcombine.low %v1431, %v1468
        %v1473 = vunpack.c.l.s4 1966171168
        %v1474 = vunpack.c.0.s8 %v1473
        %v1475 = vlaneseq
        %v1476 = vshrl.u32 %v1475, 7
        %v1477 = vsub.s32 %v1474, %v1476
        %v1478 = vrot.slane %v1471, %v1477
        %v1480 = vunpack.c.l.s4 1966171168
        %v1481 = vunpack.c.0.s8 %v1480
        %v1482 = vlaneseq
        %v1483 = vshrl.u32 %v1482, 7
        %v1484 = vsub.s32 %v1481, %v1483
        %v1485 = vrot.slane %v1478, %v1484
        %v1487 = vadd.f32 %v1330, %v1485
        %v1488 = vlaneseq
        %vm1489 = vcmp.ge.s32.totalorder %v1488, 0
        %vm1490 = vcmp.lt.s32.totalorder %v1488, 256
        %vm1491 = vmand %vm1489, %vm1490
        %1492 = vst.msk [vmem:[#allocation2] sm:$0x3] %vm1491, %v1487
        // Predicated region
        $region45: #{cross_layer_transcode.1} parent=39 // pred_check
          %p1493 = pneg %p404
        $region46: #{cross_layer_transcode.1} parent=39 // pred_check_branch
          %1495 = sbr.rel (%p1493) target = $region48
        $region47: #{cross_layer_transcode.1} parent=39 // pred_region
          %v1496 = vld [vmem:[#allocation2] sm:$0x3]
          %v1497 = vmul.f32 %v1496, 0.00390625
          %1498 = vst.msk [vmem:[%s402] sm:$0x3] %vm1491, %v1497
        $region48: #{cross_layer_transcode.1} parent=39 // pred_fallthru
          _
        %s1499 = sand.u32 %s179, 1
        %s1500 = scalar_lea.sflag [#allocation4], %s1499
        %s1501 = sand.u32 %s179, 1
        %s1502 = smul.addr %s1501, 512
        %s1503 = scalar_lea.vmem [#allocation3], %s1502
        %s1504 = sand.u32 %s207, 1
        %s1505 = scalar_lea.sflag [#allocation6], %s1504
        %s1506 = sand.u32 %s207, 1
        %s1507 = smul.addr %s1506, 256
        %s1508 = scalar_lea.vmem [#allocation5], %s1507
        %p1509 = scmp.lt.s32.totalorder %s29, 1
        %s1510 = scalar_select %p1509, %s29, 1
        %s1511 = smul.addr %s1510, 2
        %s1512 = scalar_lea.vmem %s7, %s1511
        // Predicated region
        $region49: #{cross_layer_transcode.1} parent=39 // pred_check
          %p1513 = pneg %p189
        $region50: #{cross_layer_transcode.1} parent=39 // pred_check_branch
          %1515 = sbr.rel (%p1513) target = $region52
        $region51: #{cross_layer_transcode.1} parent=39 // pred_region
          %s1516 = smul.u32 32, %s30
          %s1518 = ssub.s32 8192, 8192
          %1519 = vsyncadd %s1500, %s1518
          %s1520 = smul.addr %s1516, 2
          %s1521 = smul.addr %s29, 64
          %s1522 = sadd.s32 %s1520, %s1521
          %s1523 = smul.addr %s1522, 128
          %s1524 = scalar_lea.hbm %s5, %s1523
          %s1525 = sshll.u32 %s1503, 4
          %s1526 = int_to_ptr.vmem [resolvable:$true] %s1525
          %1531 = dma.vmem_to_hbm [thread:$0]  %s1526, 8192, %s1524, %s1500, 256, 256, 16
        $region52: #{cross_layer_transcode.1} parent=39 // pred_fallthru
          _
        // Predicated region
        $region53: #{cross_layer_transcode.1} parent=39 // pred_check
          %p1532 = pneg %p217
        $region54: #{cross_layer_transcode.1} parent=39 // pred_check_branch
          %1534 = sbr.rel (%p1532) target = $region56
        $region55: #{cross_layer_transcode.1} parent=39 // pred_region
          %s1535 = smul.u32 32, %s30
          %s1537 = ssub.s32 4096, 4096
          %1538 = vsyncadd %s1505, %s1537
          %s1539 = smul.addr %s29, 32
          %s1540 = sadd.s32 %s1535, %s1539
          %s1541 = smul.addr %s1540, 128
          %s1542 = scalar_lea.hbm %s6, %s1541
          %s1543 = sshll.u32 %s1508, 4
          %s1544 = int_to_ptr.vmem [resolvable:$true] %s1543
          %1549 = dma.vmem_to_hbm [thread:$0]  %s1544, 4096, %s1542, %s1505, 128, 128, 8
        $region56: #{cross_layer_transcode.1} parent=39 // pred_fallthru
          _
        // Predicated region
        $region57: #{cross_layer_transcode.1} parent=39 // pred_check
          %p1550 = pneg %p243
        $region58: #{cross_layer_transcode.1} parent=39 // pred_check_branch
          %1552 = sbr.rel (%p1550) target = $region60
        $region59: #{cross_layer_transcode.1} parent=39 // pred_region
          _
        $region60: #{cross_layer_transcode.1} parent=39 // pred_fallthru
          _
      $region40: #{cross_layer_transcode.1} parent=5 // pred_fallthru
        _
      %p1553 = scmp.le.s32.totalorder 2, %s20
      // Predicated region
      $region61: #{cross_layer_transcode.1} parent=5 // pred_check
        %p1554 = pneg %p1553
      $region62: #{cross_layer_transcode.1} parent=5 // pred_check_branch
        %1556 = sbr.rel (%p1554) target = $region64
      $region63: #{cross_layer_transcode.1} parent=5 // pred_region
        %s1557 = ssub.s32 %s20, 2
        // Predicated region
        $region65: #{cross_layer_transcode.1} parent=63 // pred_check
          %p1558 = pneg %p195
        $region66: #{cross_layer_transcode.1} parent=63 // pred_check_branch
          %1560 = sbr.rel (%p1558) target = $region68
        $region67: #{cross_layer_transcode.1} parent=63 // pred_region
          %s1561 = sand.u32 %s180, 1
          %s1562 = scalar_lea.sflag [#allocation4], %s1561
          %s1563 = sand.u32 %s180, 1
          %s1564 = smul.addr %s1563, 512
          %s1565 = scalar_lea.vmem [#allocation3], %s1564
          %1566 = dma.done %s1562, 8192
        $region68: #{cross_layer_transcode.1} parent=63 // pred_fallthru
          _
        // Predicated region
        $region69: #{cross_layer_transcode.1} parent=63 // pred_check
          %p1567 = pneg %p223
        $region70: #{cross_layer_transcode.1} parent=63 // pred_check_branch
          %1569 = sbr.rel (%p1567) target = $region72
        $region71: #{cross_layer_transcode.1} parent=63 // pred_region
          %s1570 = sand.u32 %s208, 1
          %s1571 = scalar_lea.sflag [#allocation6], %s1570
          %s1572 = sand.u32 %s208, 1
          %s1573 = smul.addr %s1572, 256
          %s1574 = scalar_lea.vmem [#allocation5], %s1573
          %1575 = dma.done %s1571, 4096
        $region72: #{cross_layer_transcode.1} parent=63 // pred_fallthru
          _
        // Predicated region
        $region73: #{cross_layer_transcode.1} parent=63 // pred_check
          %p1576 = pneg %p249
        $region74: #{cross_layer_transcode.1} parent=63 // pred_check_branch
          %1578 = sbr.rel (%p1576) target = $region76
        $region75: #{cross_layer_transcode.1} parent=63 // pred_region
          %p1579 = scmp.lt.s32.totalorder %s31, 1
          %s1580 = scalar_select %p1579, %s31, 1
          %s1581 = smul.addr %s1580, 2
          %s1582 = scalar_lea.vmem %s7, %s1581
        $region76: #{cross_layer_transcode.1} parent=63 // pred_fallthru
          _
      $region64: #{cross_layer_transcode.1} parent=5 // pred_fallthru
        _
    $region6: #{cross_layer_transcode.1} parent=1 // loop_footer
      %s24 = sadd.s32 1, %s20
    $region7: #{cross_layer_transcode.1} parent=1 // loop_footer_branch
      %19 = sbr.rel target = $region3
    $region8: #{cross_layer_transcode.1} parent=1 // loop_exit
      _
    %1583 = vsyncpa [#allocation4], 1
    %s1584 = scalar_lea.sflag [#allocation4], 1
    %1585 = vsyncpa %s1584, 1
    %1586 = vsyncpa [#allocation6], 1
    %s1587 = scalar_lea.sflag [#allocation6], 1
    %1588 = vsyncpa %s1587, 1

</llo_original>
